<compile_context>
chip_gen: v6e
topology: v6e:2x2x1
jax: 0.10.0
libtpu: 0.0.40
codegen_flags: <defaults>
</compile_context>

<pallas_src>
import functools

import jax
import jax.numpy as jnp
from jax.experimental import pallas as pl
from jax.experimental.pallas import tpu as pltpu

RGB_CIN, DEP_CIN = 3, 1
CIN_ALL = RGB_CIN + DEP_CIN          # 4 input channels (rgb + depth)
KC = 3 * CIN_ALL                     # 12 = 3 column taps x 4 input channels
C_FEAT = 16                          # encoder feature channels per modality
SE_HIDDEN = 4                        # squeeze-excitation bottleneck
NUM_CLASSES = 8                      # output classes

_CACHE_BUDGET_BYTES = 24 * 2**20     # bf16 feature-cache cap (v7x: 64 MiB VMEM)


# ----------------------------------------------------------------------------
# Fused kernel: encoders + SE squeeze/excite + blend + 1x1 head.
# Grid: (batch, phase, row_tile); phase 0 = features + sums (+cache),
# phase 1 = gates (at tile 0) + blend + head.
# ----------------------------------------------------------------------------
def _esanet_kernel(main_ref, halo_ref, w_all_ref, b_all_ref, w1_ref, b1_ref,
                   w2_ref, b2_ref, w_out_ref, b_out_ref, out_ref,
                   sums_ref, gates_ref, *cache_ref,
                   img_w, tile_px, n_pix, use_cache):
    ph = pl.program_id(1)
    i = pl.program_id(2)

    def encoder_feat():
        # (12, tile_px + halo) bf16 window over the column-shifted padded
        # image; the three 3x3 row taps are static lane-shifted slices of it.
        win = jnp.concatenate([main_ref[0], halo_ref[0]], axis=1)
        acc = jnp.zeros((2 * C_FEAT, tile_px), jnp.float32)
        for dy in range(3):                                  # 3 row taps
            patch = win[:, dy * img_w:dy * img_w + tile_px]  # (12, P) bf16
            acc = acc + jax.lax.dot_general(
                w_all_ref[dy], patch,
                dimension_numbers=(((1,), (0,)), ((), ())),
                preferred_element_type=jnp.float32)
        return jnp.maximum(acc + b_all_ref[...], 0.0)        # (32, P) f32

    # ---- phase 0: encoder convs, SE channel sums, bf16 feature cache ------
    @pl.when((ph == 0) & (i == 0))
    def _init_sums():
        sums_ref[...] = jnp.zeros_like(sums_ref)

    @pl.when(ph == 0)
    def _phase0():
        feat = encoder_feat()
        sums_ref[...] += jnp.sum(feat, axis=1, keepdims=True)
        if use_cache:
            off = pl.multiple_of(i * tile_px, 128)
            cache_ref[0][:, pl.ds(off, tile_px)] = feat.astype(jnp.bfloat16)

    # ---- phase transition: tiny per-batch SE gate MLPs (16 -> 4 -> 16) ----
    # Pure broadcast-multiply + axis reductions (no N=1 matmuls needed).
    @pl.when((ph == 1) & (i == 0))
    def _se_gates():
        mean = sums_ref[...] * (1.0 / float(n_pix))          # (32, 1) f32
        for m in range(2):                                   # rgb, depth
            mm = mean[m * C_FEAT:(m + 1) * C_FEAT]           # (16, 1)
            h = jnp.maximum(
                jnp.sum(w1_ref[m] * mm, axis=0, keepdims=True) + b1_ref[m],
                0.0)                                         # (1, 4)
            z = jnp.sum(w2_ref[m] * h, axis=1, keepdims=True) + b2_ref[m]
            gates_ref[m * C_FEAT:(m + 1) * C_FEAT] = 1.0 / (1.0 + jnp.exp(-z))

    # ---- phase 1: SE blend (f32, v5e-safe) + 1x1 classifier head ----------
    @pl.when(ph == 1)
    def _phase1():
        if use_cache:
            off = pl.multiple_of(i * tile_px, 128)
            feat = cache_ref[0][:, pl.ds(off, tile_px)].astype(jnp.float32)
        else:
            feat = encoder_feat()                            # recompute path
        g = gates_ref[...]                                   # (32, 1) f32
        fused = feat[:C_FEAT] * g[:C_FEAT] + feat[C_FEAT:] * g[C_FEAT:]
        logits = jnp.dot(w_out_ref[...], fused.astype(jnp.bfloat16),
                         preferred_element_type=jnp.float32)  # (8, P)
        out_ref[0] = (logits + b_out_ref[...]).astype(out_ref.dtype)


# ----------------------------------------------------------------------------
# pallas_call wrapper.
# ----------------------------------------------------------------------------
def _vmem_limit(tile_px, halo_px, n_pix, use_cache):
    est = (2 * KC * tile_px * 2                 # main cols, double-buffered
           + 2 * KC * halo_px * 2               # halo block
           + 2 * NUM_CLASSES * tile_px * 4      # logits out, double-buffered
           + (2 * C_FEAT * n_pix * 2 if use_cache else 0)   # feature cache
           + KC * (tile_px + halo_px) * 2       # in-kernel window value
           + 4 * 2 * C_FEAT * tile_px * 4       # acc/feat/fused temporaries
           + 256 * 1024)                        # params + slack
    # Ceiling of 48 MiB keeps us inside every generation's VMEM (v7x: 64 MiB).
    return int(min(48 * 2**20, max(32 * 2**20, 2 * est)))


def _esanet_pallas(cols, p, *, B, H, W, tr, halo_px, use_cache,
                   out_dtype=jnp.float32):
    T = H // tr
    tile_px = tr * W
    step = tile_px // halo_px
    n_pix = H * W

    def tidx(ph, i):
        # With the feature cache, phase 1 never reads the input: pin its block
        # index to the last phase-0 tile so no re-fetch DMA is issued.
        if use_cache:
            return i * (1 - ph) + (T - 1) * ph
        return i

    kernel = functools.partial(_esanet_kernel, img_w=W, tile_px=tile_px,
                               n_pix=n_pix, use_cache=use_cache)

    scratch = [pltpu.VMEM((2 * C_FEAT, 1), jnp.float32),   # per-batch sums
               pltpu.VMEM((2 * C_FEAT, 1), jnp.float32)]   # per-batch gates
    if use_cache:
        scratch.append(pltpu.VMEM((2 * C_FEAT, n_pix), jnp.bfloat16))

    return pl.pallas_call(
        kernel,
        out_shape=jax.ShapeDtypeStruct((B, NUM_CLASSES, n_pix), out_dtype),
        grid=(B, 2, T),
        in_specs=[
            # main tr-row block + small halo block on the SAME cols array:
            # expresses the overlapping 3x3 row window with plain Blocked
            # BlockSpecs -> VMEM stays O(tile) at any resolution.
            pl.BlockSpec((1, KC, tile_px),
                         lambda b, ph, i: (b, 0, tidx(ph, i))),
            pl.BlockSpec((1, KC, halo_px),
                         lambda b, ph, i: (b, 0, (tidx(ph, i) + 1) * step)),
            pl.BlockSpec((3, 2 * C_FEAT, KC), lambda b, ph, i: (0, 0, 0)),
            pl.BlockSpec((2 * C_FEAT, 1), lambda b, ph, i: (0, 0)),
            pl.BlockSpec((2, C_FEAT, SE_HIDDEN), lambda b, ph, i: (0, 0, 0)),
            pl.BlockSpec((2, 1, SE_HIDDEN), lambda b, ph, i: (0, 0, 0)),
            pl.BlockSpec((2, C_FEAT, SE_HIDDEN), lambda b, ph, i: (0, 0, 0)),
            pl.BlockSpec((2, C_FEAT, 1), lambda b, ph, i: (0, 0, 0)),
            pl.BlockSpec((NUM_CLASSES, C_FEAT), lambda b, ph, i: (0, 0)),
            pl.BlockSpec((NUM_CLASSES, 1), lambda b, ph, i: (0, 0)),
        ],
        # Lane-dense (classes, pixels) output; during phase 0 the index is
        # pinned to tile 0 so no stale writeback ever reaches HBM.
        out_specs=pl.BlockSpec((1, NUM_CLASSES, tile_px),
                               lambda b, ph, i: (b, 0, i * ph)),
        scratch_shapes=scratch,
        compiler_params=pltpu.CompilerParams(
            dimension_semantics=("parallel", "arbitrary", "arbitrary"),
            vmem_limit_bytes=_vmem_limit(tile_px, halo_px, n_pix, use_cache)),
    )(cols, cols, p["w_all"], p["b_all"], p["w1"], p["b1"], p["w2"], p["b2"],
      p["w_out"], p["b_out"])


# ----------------------------------------------------------------------------
# Wrapper-side glue.
# ----------------------------------------------------------------------------
def _halo_lanes(W):
    """Halo block width: >= 2 padded rows, multiple of 128 lanes."""
    return -(-2 * W // 128) * 128


def _pick_row_tile(H, W, halo_px, B, target_px=8192):
    """Rows per tile: divides H, tr*W a multiple of the halo width (hence of
    128 -> lane-dense output + aligned cache slices), ~8k px per tile; keep
    >=2 tiles only when the batch cannot fill the parallel axis (v7x 2 TCs)."""
    divs = [t for t in range(1, H + 1)
            if H % t == 0 and (t * W) % halo_px == 0]
    if not divs:
        raise ValueError(f"no valid row tile for H={H}, W={W}")
    pool = divs
    if B < 2:
        multi = [t for t in divs if H // t >= 2]
        if multi:
            pool = multi
    return min(pool, key=lambda t: abs(t * W - target_px))


def _build_cols(rgb_nchw, depth_nchw, extra_rows):
    """NCHW rgb+depth -> channel-major, zero-padded, column-shifted patches
    flattened to (B, 12, (H+2+extra)*W) bf16.  Row taps are fused in-kernel."""
    x = jnp.concatenate([rgb_nchw, depth_nchw], axis=1)          # (B, 4, H, W)
    x = jnp.transpose(x, (0, 2, 3, 1)).astype(jnp.bfloat16)      # (B, H, W, 4)
    _, H, W, _ = x.shape
    xp = jnp.pad(x, ((0, 0), (1, 1 + extra_rows), (1, 1), (0, 0)))
    cols = jnp.concatenate([xp[:, :, dx:dx + W, :] for dx in range(3)],
                           axis=-1)                              # (B,Hp,W,12)
    cols = jnp.transpose(cols, (0, 3, 1, 2))                     # (B,12,Hp,W)
    return cols.reshape(cols.shape[0], KC, -1)                   # (B,12,Hp*W)


@jax.jit
def esanet_forward(params, rgb_nchw, depth_nchw):
    B, _, H, W = rgb_nchw.shape
    halo_px = _halo_lanes(W)
    tr = _pick_row_tile(H, W, halo_px, B)
    extra = max(0, -(-halo_px // W) - 2)          # bottom rows so halo fits
    cols = _build_cols(rgb_nchw, depth_nchw, extra)
    # Gate the bf16 feature cache by VMEM budget (recompute path otherwise;
    # matters on v7x's 64 MiB VMEM at high resolution).
    use_cache = (2 * C_FEAT * H * W * 2) <= _CACHE_BUDGET_BYTES
    logits = _esanet_pallas(cols, params, B=B, H=H, W=W, tr=tr,
                            halo_px=halo_px, use_cache=use_cache)
    return logits.reshape(B, NUM_CLASSES, H, W)   # already NCHW


# ----------------------------------------------------------------------------
# Deterministic synthetic parameters (shapes follow the module structure).
# ----------------------------------------------------------------------------
def init_params(key):
    ks = jax.random.split(key, 12)

    def rnd(k, shape, fan_in):
        return jax.random.normal(k, shape, jnp.float32) / jnp.sqrt(float(fan_in))

    # Separate RGB / depth 3x3 encoders (canonical ESANet), then fused into a
    # block-diagonal channel-major weight so both modalities run in one GEMM.
    w_rgb = rnd(ks[0], (C_FEAT, RGB_CIN, 3, 3), 9 * RGB_CIN)   # (co,cin,dy,dx)
    w_dep = rnd(ks[1], (C_FEAT, DEP_CIN, 3, 3), 9 * DEP_CIN)
    b_rgb = 0.1 * jax.random.normal(ks[2], (C_FEAT,), jnp.float32)
    b_dep = 0.1 * jax.random.normal(ks[3], (C_FEAT,), jnp.float32)

    w_all = jnp.zeros((3, 2 * C_FEAT, KC), jnp.float32)
    for dy in range(3):
        for dx in range(3):
            w_all = w_all.at[dy, :C_FEAT,
                             dx * CIN_ALL:dx * CIN_ALL + RGB_CIN].set(
                                 w_rgb[:, :, dy, dx])
            w_all = w_all.at[dy, C_FEAT:, dx * CIN_ALL + RGB_CIN].set(
                w_dep[:, 0, dy, dx])

    return {
        "w_all": w_all.astype(jnp.bfloat16),                   # (3, 32, 12)
        "b_all": jnp.concatenate([b_rgb, b_dep]).reshape(2 * C_FEAT, 1),
        # SE gate MLPs (rgb / depth) stored so the in-kernel math is pure
        # broadcast-multiply + axis reductions (no tiny matmuls).
        "w1": jnp.stack([rnd(ks[4], (C_FEAT, SE_HIDDEN), C_FEAT),
                         rnd(ks[5], (C_FEAT, SE_HIDDEN), C_FEAT)]),
        "b1": 0.1 * jax.random.normal(ks[6], (2, 1, SE_HIDDEN), jnp.float32),
        "w2": jnp.stack([rnd(ks[7], (C_FEAT, SE_HIDDEN), SE_HIDDEN),
                         rnd(ks[8], (C_FEAT, SE_HIDDEN), SE_HIDDEN)]),
        "b2": 0.1 * jax.random.normal(ks[9], (2, C_FEAT, 1), jnp.float32),
        # 1x1 classifier head, (Cout, Cin) for the channel-major GEMM.
        "w_out": rnd(ks[10], (NUM_CLASSES, C_FEAT), C_FEAT).astype(jnp.bfloat16),
        "b_out": 0.1 * jax.random.normal(ks[11], (NUM_CLASSES, 1), jnp.float32),
    }


# ----------------------------------------------------------------------------
# Pure-JAX reference of the same math (bf16 at the matmul boundary) to bound
# the error of the Pallas path.
# ----------------------------------------------------------------------------
def reference_forward(p, rgb_nchw, depth_nchw):
    B, _, H, W = rgb_nchw.shape
    x = jnp.concatenate([rgb_nchw, depth_nchw], axis=1)
    x = jnp.transpose(x, (0, 2, 3, 1)).astype(jnp.bfloat16).astype(jnp.float32)
    xp = jnp.pad(x, ((0, 0), (1, 1), (1, 1), (0, 0)))
    cols = jnp.concatenate([xp[:, :, dx:dx + W, :] for dx in range(3)],
                           axis=-1)                              # (B,H+2,W,12)
    w_all = p["w_all"].astype(jnp.float32)
    acc = 0.0
    for dy in range(3):
        acc = acc + jnp.einsum("bhwk,ck->bhwc", cols[:, dy:dy + H], w_all[dy])
    feat = jnp.maximum(acc + p["b_all"][:, 0], 0.0)              # (B,H,W,32)

    means = feat.mean(axis=(1, 2))                               # (B, 32)
    gates = []
    for m in range(2):
        mm = means[:, m * C_FEAT:(m + 1) * C_FEAT]
        h = jax.nn.relu(mm @ p["w1"][m] + p["b1"][m, 0])
        gates.append(jax.nn.sigmoid(h @ p["w2"][m].T + p["b2"][m, :, 0]))
    g_r, g_d = gates

    fused = (feat[..., :C_FEAT] * g_r[:, None, None, :]
             + feat[..., C_FEAT:] * g_d[:, None, None, :])
    logits = jnp.einsum("bhwc,kc->bkhw",
                        fused.astype(jnp.bfloat16).astype(jnp.float32),
                        p["w_out"].astype(jnp.float32))
    return logits + p["b_out"].reshape(1, NUM_CLASSES, 1, 1)


if __name__ == "__main__":
    key = jax.random.PRNGKey(0)
    k_rgb, k_dep, k_par = jax.random.split(key, 3)
    B, H, W = 2, 16, 16
    rgb = jax.random.normal(k_rgb, (B, RGB_CIN, H, W), jnp.float32)    # NCHW
    depth = jax.random.normal(k_dep, (B, DEP_CIN, H, W), jnp.float32)  # NCHW

    params = init_params(k_par)
    out = esanet_forward(params, rgb, depth)
    out = jax.block_until_ready(out)
    assert out.shape == (B, NUM_CLASSES, H, W), out.shape

    ref = reference_forward(params, rgb, depth)
    max_err = float(jnp.max(jnp.abs(out - ref)))
    assert max_err < 5e-2, f"kernel/reference mismatch: max abs err {max_err}"
    print("KERNEL_OK")
</pallas_src>

<mosaic_0001>
module attributes {stable_mosaic.version = 11 : i64} {
  func.func @_esanet_kernel(%arg0: i32, %arg1: i32, %arg2: i32, %arg3: memref<1x12x256xbf16, #tpu.memory_space<vmem>>, %arg4: memref<1x12x128xbf16, #tpu.memory_space<vmem>>, %arg5: memref<3x32x12xbf16, #tpu.memory_space<vmem>>, %arg6: memref<32x1xf32, #tpu.memory_space<vmem>>, %arg7: memref<2x16x4xf32, #tpu.memory_space<vmem>>, %arg8: memref<2x1x4xf32, #tpu.memory_space<vmem>>, %arg9: memref<2x16x4xf32, #tpu.memory_space<vmem>>, %arg10: memref<2x16x1xf32, #tpu.memory_space<vmem>>, %arg11: memref<8x16xbf16, #tpu.memory_space<vmem>>, %arg12: memref<8x1xf32, #tpu.memory_space<vmem>>, %arg13: memref<1x8x256xf32, #tpu.memory_space<vmem>>, %arg14: memref<32x1xf32, #tpu.memory_space<vmem>>, %arg15: memref<32x1xf32, #tpu.memory_space<vmem>>, %arg16: memref<32x256xbf16, #tpu.memory_space<vmem>>) attributes {dimension_semantics = [#tpu.dimension_semantics<parallel>, #tpu.dimension_semantics<arbitrary>, #tpu.dimension_semantics<arbitrary>], iteration_bounds = array<i64: 2, 2, 1>, scalar_prefetch = 0 : i64, scratch_operands = 3 : i64, tpu.core_type = #tpu.core_type<tc>, window_params = [{transform_indices = @transform_0, window_bounds = array<i64: 1, 12, 256>}, {transform_indices = @transform_1, window_bounds = array<i64: 1, 12, 128>}, {pipeline_mode = #tpu.pipeline_mode<synchronous>, transform_indices = @transform_2, window_bounds = array<i64: 3, 32, 12>}, {pipeline_mode = #tpu.pipeline_mode<synchronous>, transform_indices = @transform_3, window_bounds = array<i64: 32, 1>}, {pipeline_mode = #tpu.pipeline_mode<synchronous>, transform_indices = @transform_4, window_bounds = array<i64: 2, 16, 4>}, {pipeline_mode = #tpu.pipeline_mode<synchronous>, transform_indices = @transform_5, window_bounds = array<i64: 2, 1, 4>}, {pipeline_mode = #tpu.pipeline_mode<synchronous>, transform_indices = @transform_6, window_bounds = array<i64: 2, 16, 4>}, {pipeline_mode = #tpu.pipeline_mode<synchronous>, transform_indices = @transform_7, window_bounds = array<i64: 2, 16, 1>}, {pipeline_mode = #tpu.pipeline_mode<synchronous>, transform_indices = @transform_8, window_bounds = array<i64: 8, 16>}, {pipeline_mode = #tpu.pipeline_mode<synchronous>, transform_indices = @transform_9, window_bounds = array<i64: 8, 1>}, {transform_indices = @transform_10, window_bounds = array<i64: 1, 8, 256>}]} {
    %c0_i32 = arith.constant 0 : i32
    %0 = arith.cmpi eq, %arg1, %c0_i32 : i32
    %c0_i32_0 = arith.constant 0 : i32
    %1 = arith.cmpi eq, %arg2, %c0_i32_0 : i32
    %2 = arith.andi %0, %1 : i1
    %3 = arith.extui %2 : i1 to i32
    %c0_i32_1 = arith.constant 0 : i32
    %4 = arith.cmpi ne, %3, %c0_i32_1 : i32
    scf.if %4 {
      %cst = arith.constant 0.000000e+00 : f32
      %16 = vector.broadcast %cst : f32 to vector<32x1xf32>
      %c0 = arith.constant 0 : index
      %c0_8 = arith.constant 0 : index
      %17 = vector.load %arg14[%c0, %c0_8] : memref<32x1xf32, #tpu.memory_space<vmem>>, vector<32x1xf32>
      tpu.vector_store %arg14[%c0, %c0_8], %16 {strides = array<i32>} : memref<32x1xf32, #tpu.memory_space<vmem>>, vector<32x1xf32>,
    } else {
    }
    %c0_i32_2 = arith.constant 0 : i32
    %5 = arith.cmpi eq, %arg1, %c0_i32_2 : i32
    %6 = arith.extui %5 : i1 to i32
    %c0_i32_3 = arith.constant 0 : i32
    %7 = arith.cmpi ne, %6, %c0_i32_3 : i32
    scf.if %7 {
      %c0 = arith.constant 0 : index
      %c0_8 = arith.constant 0 : index
      %c0_9 = arith.constant 0 : index
      %16 = vector.load %arg3[%c0, %c0_8, %c0_9] : memref<1x12x256xbf16, #tpu.memory_space<vmem>>, vector<1x12x256xbf16>
      %17 = vector.shape_cast %16 : vector<1x12x256xbf16> to vector<12x256xbf16>
      %c0_10 = arith.constant 0 : index
      %c0_11 = arith.constant 0 : index
      %c0_12 = arith.constant 0 : index
      %18 = vector.load %arg4[%c0_10, %c0_11, %c0_12] : memref<1x12x128xbf16, #tpu.memory_space<vmem>>, vector<1x12x128xbf16>
      %19 = vector.shape_cast %18 : vector<1x12x128xbf16> to vector<12x128xbf16>
      %20 = tpu.concatenate %17, %19 in 1 : vector<12x256xbf16>, vector<12x128xbf16> -> vector<12x384xbf16>
      %cst = arith.constant 0.000000e+00 : f32
      %21 = vector.broadcast %cst : f32 to vector<32x256xf32>
      %22 = vector.extract_strided_slice %20 {offsets = [0, 0], sizes = [12, 256], strides = [1, 1]} : vector<12x384xbf16> to vector<12x256xbf16>
      %c0_13 = arith.constant 0 : index
      %c0_14 = arith.constant 0 : index
      %c0_15 = arith.constant 0 : index
      %23 = vector.load %arg5[%c0_13, %c0_14, %c0_15] : memref<3x32x12xbf16, #tpu.memory_space<vmem>>, vector<1x32x12xbf16>
      %24 = vector.shape_cast %23 : vector<1x32x12xbf16> to vector<32x12xbf16>
      %cst_16 = arith.constant dense<0.000000e+00> : vector<32x256xf32>
      %25 = tpu.matmul %24, %22, %cst_16 {dimension_numbers = #tpu.dot_dimension_numbers<[1], [0], [0], [1], [0, 0, 1, 1], [], []>} : vector<32x12xbf16>, vector<12x256xbf16>, vector<32x256xf32> -> vector<32x256xf32>
      %26 = arith.addf %21, %25 : vector<32x256xf32>
      %27 = vector.extract_strided_slice %20 {offsets = [0, 16], sizes = [12, 256], strides = [1, 1]} : vector<12x384xbf16> to vector<12x256xbf16>
      %c1 = arith.constant 1 : index
      %c0_17 = arith.constant 0 : index
      %c0_18 = arith.constant 0 : index
      %28 = vector.load %arg5[%c1, %c0_17, %c0_18] : memref<3x32x12xbf16, #tpu.memory_space<vmem>>, vector<1x32x12xbf16>
      %29 = vector.shape_cast %28 : vector<1x32x12xbf16> to vector<32x12xbf16>
      %cst_19 = arith.constant dense<0.000000e+00> : vector<32x256xf32>
      %30 = tpu.matmul %29, %27, %cst_19 {dimension_numbers = #tpu.dot_dimension_numbers<[1], [0], [0], [1], [0, 0, 1, 1], [], []>} : vector<32x12xbf16>, vector<12x256xbf16>, vector<32x256xf32> -> vector<32x256xf32>
      %31 = arith.addf %26, %30 : vector<32x256xf32>
      %32 = vector.extract_strided_slice %20 {offsets = [0, 32], sizes = [12, 256], strides = [1, 1]} : vector<12x384xbf16> to vector<12x256xbf16>
      %c2 = arith.constant 2 : index
      %c0_20 = arith.constant 0 : index
      %c0_21 = arith.constant 0 : index
      %33 = vector.load %arg5[%c2, %c0_20, %c0_21] : memref<3x32x12xbf16, #tpu.memory_space<vmem>>, vector<1x32x12xbf16>
      %34 = vector.shape_cast %33 : vector<1x32x12xbf16> to vector<32x12xbf16>
      %cst_22 = arith.constant dense<0.000000e+00> : vector<32x256xf32>
      %35 = tpu.matmul %34, %32, %cst_22 {dimension_numbers = #tpu.dot_dimension_numbers<[1], [0], [0], [1], [0, 0, 1, 1], [], []>} : vector<32x12xbf16>, vector<12x256xbf16>, vector<32x256xf32> -> vector<32x256xf32>
      %36 = arith.addf %31, %35 : vector<32x256xf32>
      %c0_23 = arith.constant 0 : index
      %c0_24 = arith.constant 0 : index
      %37 = vector.load %arg6[%c0_23, %c0_24] : memref<32x1xf32, #tpu.memory_space<vmem>>, vector<32x1xf32>
      %38 = vector.broadcast %37 : vector<32x1xf32> to vector<32x256xf32>
      %39 = arith.addf %36, %38 : vector<32x256xf32>
      %cst_25 = arith.constant 0.000000e+00 : f32
      %40 = vector.broadcast %cst_25 : f32 to vector<32x256xf32>
      %41 = arith.maximumf %39, %40 : vector<32x256xf32>
      %c0_26 = arith.constant 0 : index
      %c0_27 = arith.constant 0 : index
      %42 = vector.load %arg14[%c0_26, %c0_27] : memref<32x1xf32, #tpu.memory_space<vmem>>, vector<32x1xf32>
      %cst_28 = arith.constant dense<0.000000e+00> : vector<32xf32>
      %43 = vector.multi_reduction <add>, %41, %cst_28 [1] : vector<32x256xf32> to vector<32xf32>
      %44 = vector.shape_cast %43 : vector<32xf32> to vector<32x1xf32>
      %45 = arith.addf %42, %44 : vector<32x1xf32>
      %c0_29 = arith.constant 0 : index
      %c0_30 = arith.constant 0 : index
      %46 = vector.load %arg14[%c0_29, %c0_30] : memref<32x1xf32, #tpu.memory_space<vmem>>, vector<32x1xf32>
      tpu.vector_store %arg14[%c0_29, %c0_30], %45 {strides = array<i32>} : memref<32x1xf32, #tpu.memory_space<vmem>>, vector<32x1xf32>,
      %c256_i32 = arith.constant 256 : i32
      %47 = arith.muli %arg2, %c256_i32 : i32
      %48 = tpu.assume_multiple %47, 128 : i32
      %49 = arith.truncf %41 : vector<32x256xf32> to vector<32x256xbf16>
      %c0_31 = arith.constant 0 : index
      %50 = arith.index_cast %48 : i32 to index
      %51 = vector.load %arg16[%c0_31, %50] : memref<32x256xbf16, #tpu.memory_space<vmem>>, vector<32x256xbf16>
      tpu.vector_store %arg16[%c0_31, %50], %49 {strides = array<i32>} : memref<32x256xbf16, #tpu.memory_space<vmem>>, vector<32x256xbf16>,
    } else {
    }
    %c1_i32 = arith.constant 1 : i32
    %8 = arith.cmpi eq, %arg1, %c1_i32 : i32
    %c0_i32_4 = arith.constant 0 : i32
    %9 = arith.cmpi eq, %arg2, %c0_i32_4 : i32
    %10 = arith.andi %8, %9 : i1
    %11 = arith.extui %10 : i1 to i32
    %c0_i32_5 = arith.constant 0 : i32
    %12 = arith.cmpi ne, %11, %c0_i32_5 : i32
    scf.if %12 {
      %c0 = arith.constant 0 : index
      %c0_8 = arith.constant 0 : index
      %16 = vector.load %arg14[%c0, %c0_8] : memref<32x1xf32, #tpu.memory_space<vmem>>, vector<32x1xf32>
      %cst = arith.constant 3.906250e-03 : f32
      %17 = vector.broadcast %cst : f32 to vector<32x1xf32>
      %18 = arith.mulf %16, %17 : vector<32x1xf32>
      %19 = vector.extract_strided_slice %18 {offsets = [0, 0], sizes = [16, 1], strides = [1, 1]} : vector<32x1xf32> to vector<16x1xf32>
      %c0_9 = arith.constant 0 : index
      %c0_10 = arith.constant 0 : index
      %c0_11 = arith.constant 0 : index
      %20 = vector.load %arg7[%c0_9, %c0_10, %c0_11] : memref<2x16x4xf32, #tpu.memory_space<vmem>>, vector<1x16x4xf32>
      %21 = vector.shape_cast %20 : vector<1x16x4xf32> to vector<16x4xf32>
      %22 = vector.broadcast %19 : vector<16x1xf32> to vector<16x4xf32>
      %23 = arith.mulf %21, %22 : vector<16x4xf32>
      %cst_12 = arith.constant dense<0.000000e+00> : vector<4xf32>
      %24 = vector.multi_reduction <add>, %23, %cst_12 [0] : vector<16x4xf32> to vector<4xf32>
      %25 = vector.shape_cast %24 : vector<4xf32> to vector<1x4xf32>
      %c0_13 = arith.constant 0 : index
      %c0_14 = arith.constant 0 : index
      %c0_15 = arith.constant 0 : index
      %26 = vector.load %arg8[%c0_13, %c0_14, %c0_15] : memref<2x1x4xf32, #tpu.memory_space<vmem>>, vector<1x1x4xf32>
      %27 = vector.shape_cast %26 : vector<1x1x4xf32> to vector<1x4xf32>
      %28 = arith.addf %25, %27 : vector<1x4xf32>
      %cst_16 = arith.constant 0.000000e+00 : f32
      %29 = vector.broadcast %cst_16 : f32 to vector<1x4xf32>
      %30 = arith.maximumf %28, %29 : vector<1x4xf32>
      %c0_17 = arith.constant 0 : index
      %c0_18 = arith.constant 0 : index
      %c0_19 = arith.constant 0 : index
      %31 = vector.load %arg9[%c0_17, %c0_18, %c0_19] : memref<2x16x4xf32, #tpu.memory_space<vmem>>, vector<1x16x4xf32>
      %32 = vector.shape_cast %31 : vector<1x16x4xf32> to vector<16x4xf32>
      %33 = vector.broadcast %30 : vector<1x4xf32> to vector<16x4xf32>
      %34 = arith.mulf %32, %33 : vector<16x4xf32>
      %cst_20 = arith.constant dense<0.000000e+00> : vector<16xf32>
      %35 = vector.multi_reduction <add>, %34, %cst_20 [1] : vector<16x4xf32> to vector<16xf32>
      %36 = vector.shape_cast %35 : vector<16xf32> to vector<16x1xf32>
      %c0_21 = arith.constant 0 : index
      %c0_22 = arith.constant 0 : index
      %c0_23 = arith.constant 0 : index
      %37 = vector.load %arg10[%c0_21, %c0_22, %c0_23] : memref<2x16x1xf32, #tpu.memory_space<vmem>>, vector<1x16x1xf32>
      %38 = vector.shape_cast %37 : vector<1x16x1xf32> to vector<16x1xf32>
      %39 = arith.addf %36, %38 : vector<16x1xf32>
      %cst_24 = arith.constant 0.000000e+00 : f32
      %40 = vector.broadcast %cst_24 : f32 to vector<16x1xf32>
      %41 = arith.subf %40, %39 : vector<16x1xf32>
      %42 = math.exp %41 : vector<16x1xf32>
      %cst_25 = arith.constant 1.000000e+00 : f32
      %43 = vector.broadcast %cst_25 : f32 to vector<16x1xf32>
      %44 = arith.addf %43, %42 : vector<16x1xf32>
      %cst_26 = arith.constant 1.000000e+00 : f32
      %45 = vector.broadcast %cst_26 : f32 to vector<16x1xf32>
      %46 = arith.divf %45, %44 : vector<16x1xf32>
      %c0_27 = arith.constant 0 : index
      %c0_28 = arith.constant 0 : index
      %47 = vector.load %arg15[%c0_27, %c0_28] : memref<32x1xf32, #tpu.memory_space<vmem>>, vector<16x1xf32>
      tpu.vector_store %arg15[%c0_27, %c0_28], %46 {strides = array<i32>} : memref<32x1xf32, #tpu.memory_space<vmem>>, vector<16x1xf32>,
      %48 = vector.extract_strided_slice %18 {offsets = [16, 0], sizes = [16, 1], strides = [1, 1]} : vector<32x1xf32> to vector<16x1xf32>
      %c1 = arith.constant 1 : index
      %c0_29 = arith.constant 0 : index
      %c0_30 = arith.constant 0 : index
      %49 = vector.load %arg7[%c1, %c0_29, %c0_30] : memref<2x16x4xf32, #tpu.memory_space<vmem>>, vector<1x16x4xf32>
      %50 = vector.shape_cast %49 : vector<1x16x4xf32> to vector<16x4xf32>
      %51 = vector.broadcast %48 : vector<16x1xf32> to vector<16x4xf32>
      %52 = arith.mulf %50, %51 : vector<16x4xf32>
      %cst_31 = arith.constant dense<0.000000e+00> : vector<4xf32>
      %53 = vector.multi_reduction <add>, %52, %cst_31 [0] : vector<16x4xf32> to vector<4xf32>
      %54 = vector.shape_cast %53 : vector<4xf32> to vector<1x4xf32>
      %c1_32 = arith.constant 1 : index
      %c0_33 = arith.constant 0 : index
      %c0_34 = arith.constant 0 : index
      %55 = vector.load %arg8[%c1_32, %c0_33, %c0_34] : memref<2x1x4xf32, #tpu.memory_space<vmem>>, vector<1x1x4xf32>
      %56 = vector.shape_cast %55 : vector<1x1x4xf32> to vector<1x4xf32>
      %57 = arith.addf %54, %56 : vector<1x4xf32>
      %cst_35 = arith.constant 0.000000e+00 : f32
      %58 = vector.broadcast %cst_35 : f32 to vector<1x4xf32>
      %59 = arith.maximumf %57, %58 : vector<1x4xf32>
      %c1_36 = arith.constant 1 : index
      %c0_37 = arith.constant 0 : index
      %c0_38 = arith.constant 0 : index
      %60 = vector.load %arg9[%c1_36, %c0_37, %c0_38] : memref<2x16x4xf32, #tpu.memory_space<vmem>>, vector<1x16x4xf32>
      %61 = vector.shape_cast %60 : vector<1x16x4xf32> to vector<16x4xf32>
      %62 = vector.broadcast %59 : vector<1x4xf32> to vector<16x4xf32>
      %63 = arith.mulf %61, %62 : vector<16x4xf32>
      %cst_39 = arith.constant dense<0.000000e+00> : vector<16xf32>
      %64 = vector.multi_reduction <add>, %63, %cst_39 [1] : vector<16x4xf32> to vector<16xf32>
      %65 = vector.shape_cast %64 : vector<16xf32> to vector<16x1xf32>
      %c1_40 = arith.constant 1 : index
      %c0_41 = arith.constant 0 : index
      %c0_42 = arith.constant 0 : index
      %66 = vector.load %arg10[%c1_40, %c0_41, %c0_42] : memref<2x16x1xf32, #tpu.memory_space<vmem>>, vector<1x16x1xf32>
      %67 = vector.shape_cast %66 : vector<1x16x1xf32> to vector<16x1xf32>
      %68 = arith.addf %65, %67 : vector<16x1xf32>
      %cst_43 = arith.constant 0.000000e+00 : f32
      %69 = vector.broadcast %cst_43 : f32 to vector<16x1xf32>
      %70 = arith.subf %69, %68 : vector<16x1xf32>
      %71 = math.exp %70 : vector<16x1xf32>
      %cst_44 = arith.constant 1.000000e+00 : f32
      %72 = vector.broadcast %cst_44 : f32 to vector<16x1xf32>
      %73 = arith.addf %72, %71 : vector<16x1xf32>
      %cst_45 = arith.constant 1.000000e+00 : f32
      %74 = vector.broadcast %cst_45 : f32 to vector<16x1xf32>
      %75 = arith.divf %74, %73 : vector<16x1xf32>
      %c16 = arith.constant 16 : index
      %c0_46 = arith.constant 0 : index
      %76 = vector.load %arg15[%c16, %c0_46] : memref<32x1xf32, #tpu.memory_space<vmem>>, vector<16x1xf32>
      tpu.vector_store %arg15[%c16, %c0_46], %75 {strides = array<i32>} : memref<32x1xf32, #tpu.memory_space<vmem>>, vector<16x1xf32>,
    } else {
    }
    %c1_i32_6 = arith.constant 1 : i32
    %13 = arith.cmpi eq, %arg1, %c1_i32_6 : i32
    %14 = arith.extui %13 : i1 to i32
    %c0_i32_7 = arith.constant 0 : i32
    %15 = arith.cmpi ne, %14, %c0_i32_7 : i32
    scf.if %15 {
      %c256_i32 = arith.constant 256 : i32
      %16 = arith.muli %arg2, %c256_i32 : i32
      %17 = tpu.assume_multiple %16, 128 : i32
      %c0 = arith.constant 0 : index
      %18 = arith.index_cast %17 : i32 to index
      %19 = vector.load %arg16[%c0, %18] : memref<32x256xbf16, #tpu.memory_space<vmem>>, vector<32x256xbf16>
      %20 = arith.extf %19 : vector<32x256xbf16> to vector<32x256xf32>
      %c0_8 = arith.constant 0 : index
      %c0_9 = arith.constant 0 : index
      %21 = vector.load %arg15[%c0_8, %c0_9] : memref<32x1xf32, #tpu.memory_space<vmem>>, vector<32x1xf32>
      %22 = vector.extract_strided_slice %20 {offsets = [0, 0], sizes = [16, 256], strides = [1, 1]} : vector<32x256xf32> to vector<16x256xf32>
      %23 = vector.extract_strided_slice %21 {offsets = [0, 0], sizes = [16, 1], strides = [1, 1]} : vector<32x1xf32> to vector<16x1xf32>
      %24 = vector.broadcast %23 : vector<16x1xf32> to vector<16x256xf32>
      %25 = arith.mulf %22, %24 : vector<16x256xf32>
      %26 = vector.extract_strided_slice %20 {offsets = [16, 0], sizes = [16, 256], strides = [1, 1]} : vector<32x256xf32> to vector<16x256xf32>
      %27 = vector.extract_strided_slice %21 {offsets = [16, 0], sizes = [16, 1], strides = [1, 1]} : vector<32x1xf32> to vector<16x1xf32>
      %28 = vector.broadcast %27 : vector<16x1xf32> to vector<16x256xf32>
      %29 = arith.mulf %26, %28 : vector<16x256xf32>
      %30 = arith.addf %25, %29 : vector<16x256xf32>
      %c0_10 = arith.constant 0 : index
      %c0_11 = arith.constant 0 : index
      %31 = vector.load %arg11[%c0_10, %c0_11] : memref<8x16xbf16, #tpu.memory_space<vmem>>, vector<8x16xbf16>
      %32 = arith.truncf %30 : vector<16x256xf32> to vector<16x256xbf16>
      %cst = arith.constant dense<0.000000e+00> : vector<8x256xf32>
      %33 = tpu.matmul %31, %32, %cst {dimension_numbers = #tpu.dot_dimension_numbers<[1], [0], [0], [1], [0, 0, 1, 1], [], []>} : vector<8x16xbf16>, vector<16x256xbf16>, vector<8x256xf32> -> vector<8x256xf32>
      %c0_12 = arith.constant 0 : index
      %c0_13 = arith.constant 0 : index
      %34 = vector.load %arg12[%c0_12, %c0_13] : memref<8x1xf32, #tpu.memory_space<vmem>>, vector<8x1xf32>
      %35 = vector.broadcast %34 : vector<8x1xf32> to vector<8x256xf32>
      %36 = arith.addf %33, %35 : vector<8x256xf32>
      %c0_14 = arith.constant 0 : index
      %c0_15 = arith.constant 0 : index
      %c0_16 = arith.constant 0 : index
      %37 = vector.load %arg13[%c0_14, %c0_15, %c0_16] : memref<1x8x256xf32, #tpu.memory_space<vmem>>, vector<1x8x256xf32>
      %38 = vector.shape_cast %37 : vector<1x8x256xf32> to vector<8x256xf32>
      %39 = vector.shape_cast %36 : vector<8x256xf32> to vector<1x8x256xf32>
      tpu.vector_store %arg13[%c0_14, %c0_15, %c0_16], %39 {strides = array<i32>} : memref<1x8x256xf32, #tpu.memory_space<vmem>>, vector<1x8x256xf32>,
    } else {
    }
    return
  }
  func.func @transform_0(%arg0: i32, %arg1: i32, %arg2: i32) -> (i32, i32, i32) {
    %c1_i32 = arith.constant 1 : i32
    %0 = arith.subi %c1_i32, %arg1 : i32
    %1 = arith.muli %arg2, %0 : i32
    %c0_i32 = arith.constant 0 : i32
    %2 = arith.muli %c0_i32, %arg1 : i32
    %3 = arith.addi %1, %2 : i32
    %c0_i32_0 = arith.constant 0 : i32
    %c0_i32_1 = arith.constant 0 : i32
    return %arg0, %c0_i32_0, %3 : i32, i32, i32
  }
  func.func @transform_1(%arg0: i32, %arg1: i32, %arg2: i32) -> (i32, i32, i32) {
    %c1_i32 = arith.constant 1 : i32
    %0 = arith.subi %c1_i32, %arg1 : i32
    %1 = arith.muli %arg2, %0 : i32
    %c0_i32 = arith.constant 0 : i32
    %2 = arith.muli %c0_i32, %arg1 : i32
    %3 = arith.addi %1, %2 : i32
    %c1_i32_0 = arith.constant 1 : i32
    %4 = arith.addi %3, %c1_i32_0 : i32
    %c2_i32 = arith.constant 2 : i32
    %5 = arith.muli %4, %c2_i32 : i32
    %c0_i32_1 = arith.constant 0 : i32
    %c0_i32_2 = arith.constant 0 : i32
    return %arg0, %c0_i32_1, %5 : i32, i32, i32
  }
  func.func @transform_2(%arg0: i32, %arg1: i32, %arg2: i32) -> (i32, i32, i32) {
    %c0_i32 = arith.constant 0 : i32
    %c0_i32_0 = arith.constant 0 : i32
    %c0_i32_1 = arith.constant 0 : i32
    %c0_i32_2 = arith.constant 0 : i32
    return %c0_i32, %c0_i32_0, %c0_i32_1 : i32, i32, i32
  }
  func.func @transform_3(%arg0: i32, %arg1: i32, %arg2: i32) -> (i32, i32) {
    %c0_i32 = arith.constant 0 : i32
    %c0_i32_0 = arith.constant 0 : i32
    %c0_i32_1 = arith.constant 0 : i32
    return %c0_i32, %c0_i32_0 : i32, i32
  }
  func.func @transform_4(%arg0: i32, %arg1: i32, %arg2: i32) -> (i32, i32, i32) {
    %c0_i32 = arith.constant 0 : i32
    %c0_i32_0 = arith.constant 0 : i32
    %c0_i32_1 = arith.constant 0 : i32
    %c0_i32_2 = arith.constant 0 : i32
    return %c0_i32, %c0_i32_0, %c0_i32_1 : i32, i32, i32
  }
  func.func @transform_5(%arg0: i32, %arg1: i32, %arg2: i32) -> (i32, i32, i32) {
    %c0_i32 = arith.constant 0 : i32
    %c0_i32_0 = arith.constant 0 : i32
    %c0_i32_1 = arith.constant 0 : i32
    %c0_i32_2 = arith.constant 0 : i32
    return %c0_i32, %c0_i32_0, %c0_i32_1 : i32, i32, i32
  }
  func.func @transform_6(%arg0: i32, %arg1: i32, %arg2: i32) -> (i32, i32, i32) {
    %c0_i32 = arith.constant 0 : i32
    %c0_i32_0 = arith.constant 0 : i32
    %c0_i32_1 = arith.constant 0 : i32
    %c0_i32_2 = arith.constant 0 : i32
    return %c0_i32, %c0_i32_0, %c0_i32_1 : i32, i32, i32
  }
  func.func @transform_7(%arg0: i32, %arg1: i32, %arg2: i32) -> (i32, i32, i32) {
    %c0_i32 = arith.constant 0 : i32
    %c0_i32_0 = arith.constant 0 : i32
    %c0_i32_1 = arith.constant 0 : i32
    %c0_i32_2 = arith.constant 0 : i32
    return %c0_i32, %c0_i32_0, %c0_i32_1 : i32, i32, i32
  }
  func.func @transform_8(%arg0: i32, %arg1: i32, %arg2: i32) -> (i32, i32) {
    %c0_i32 = arith.constant 0 : i32
    %c0_i32_0 = arith.constant 0 : i32
    %c0_i32_1 = arith.constant 0 : i32
    return %c0_i32, %c0_i32_0 : i32, i32
  }
  func.func @transform_9(%arg0: i32, %arg1: i32, %arg2: i32) -> (i32, i32) {
    %c0_i32 = arith.constant 0 : i32
    %c0_i32_0 = arith.constant 0 : i32
    %c0_i32_1 = arith.constant 0 : i32
    return %c0_i32, %c0_i32_0 : i32, i32
  }
  func.func @transform_10(%arg0: i32, %arg1: i32, %arg2: i32) -> (i32, i32, i32) {
    %0 = arith.muli %arg2, %arg1 : i32
    %c0_i32 = arith.constant 0 : i32
    %c0_i32_0 = arith.constant 0 : i32
    return %arg0, %c0_i32, %0 : i32, i32, i32
  }
}

</mosaic_0001>

<llo_original>
// kernel: esanet_forward.1
$region0: #{esanet_forward.1}
  #allocation0 [shape = 'u32[]', space=smem, size = 0x4, offset = 0x4, fixed_abs, tag = 'smem constant byte address 0x4 - core index']
  #allocation1 [shape = 'u32[144,128]{1,0:T(1,128)}', space=vmem, size = 0x12000, scoped, tag = 'internal scratch']
  #allocation2 [shape = 'f32[32,1]{1,0:T(8,128)}', space=vmem, size = 0x4000, scoped, tag = 'scratch operand']
  #allocation3 [shape = 'f32[32,1]{1,0:T(8,128)}', space=vmem, size = 0x4000, scoped, tag = 'scratch operand']
  #allocation4 [shape = 'bf16[32,256]{1,0:T(8,128)(2,1)}', space=vmem, size = 0x4000, scoped, tag = 'scratch operand']
  %s0 = inlined_call_operand.vmem [shape: bf16[2,12,384], index: 0, kind: input, shape index: {}, may-alias: {0,1}]
  %s1 = inlined_call_operand.vmem [shape: bf16[2,12,384], index: 1, kind: input, shape index: {}, may-alias: {0,1}]
  %s2 = inlined_call_operand.vmem [shape: bf16[3,32,12], index: 2, kind: input, shape index: {}]
  %s3 = inlined_call_operand.vmem [shape: f32[32,1], index: 3, kind: input, shape index: {}]
  %s4 = inlined_call_operand.vmem [shape: f32[2,16,4], index: 4, kind: input, shape index: {}]
  %s5 = inlined_call_operand.vmem [shape: f32[2,1,4], index: 5, kind: input, shape index: {}]
  %s6 = inlined_call_operand.vmem [shape: f32[2,16,4], index: 6, kind: input, shape index: {}]
  %s7 = inlined_call_operand.vmem [shape: f32[2,16,1], index: 7, kind: input, shape index: {}]
  %s8 = inlined_call_operand.vmem [shape: bf16[8,16], index: 8, kind: input, shape index: {}]
  %s9 = inlined_call_operand.vmem [shape: f32[8,1], index: 9, kind: input, shape index: {}]
  %s10 = inlined_call_operand.vmem [shape: f32[2,8,256], index: 10, kind: output, shape index: {}]
  %s11 = sld [smem:[#allocation0]]
  $region196: #{esanet_forward.1} parent=0
    _
  %s13 = ssub.s32 1, %s11
  %s14 = scalar_select 0, %s13, %s11
  $region1: #{esanet_forward.1} parent=0
    #allocation5 [shape = 'u8[16384]{0}', space=vmem, size = 0x4000, scoped, tag = 'input window, operand 0']
    #allocation6 [shape = 'u8[8192]{0}', space=vmem, size = 0x2000, scoped, tag = 'input window, operand 1']
    loop: start=0, step=1, limit=6
    $region2: #{esanet_forward.1} parent=1 // loop_pre_header
      _
    $region3: #{esanet_forward.1} parent=1 // loop_header
      %s16 = sphi 0, %s20
      %p17 = scmp.ge.s32.totalorder %s16, 6
      %s23 = sphi 0, %s42
      %s24 = sphi 0, %s38
      %s25 = sphi 0, %s34
      %s26 = sphi 0, %s23
      %s27 = sphi 0, %s24
      %s28 = sphi 0, %s25
      %s29 = sphi 0, %s26
      %s30 = sphi 0, %s27
      %s31 = sphi 0, %s28
      %s51 = sphi 0, %s53
      %s54 = sphi 0, %s51
      %s55 = sphi 0, %s54
      %s71 = sphi 0, %s55
      %s87 = sphi 0, %s89
      %s90 = sphi 0, %s87
      %s91 = sphi 0, %s90
      %s107 = sphi 0, %s91
      %s111 = sphi 0, %s111
      %s113 = sphi 0, %s111
      %s114 = sphi 0, %s113
      %s128 = sphi 0, %s114
      %s132 = sphi 0, %s132
      %s134 = sphi 0, %s132
      %s135 = sphi 0, %s134
      %s149 = sphi 0, %s135
      %s153 = sphi 0, %s153
      %s155 = sphi 0, %s153
      %s156 = sphi 0, %s155
      %s170 = sphi 0, %s156
      %s174 = sphi 0, %s174
      %s176 = sphi 0, %s174
      %s177 = sphi 0, %s176
      %s191 = sphi 0, %s177
      %s195 = sphi 0, %s195
      %s197 = sphi 0, %s195
      %s198 = sphi 0, %s197
      %s212 = sphi 0, %s198
      %s216 = sphi 0, %s216
      %s218 = sphi 0, %s216
      %s219 = sphi 0, %s218
      %s233 = sphi 0, %s219
      %s237 = sphi 0, %s237
      %s239 = sphi 0, %s237
      %s240 = sphi 0, %s239
      %s254 = sphi 0, %s240
      %s258 = sphi 0, %s258
      %s260 = sphi 0, %s258
      %s261 = sphi 0, %s260
      %s275 = sphi 0, %s261
      %s285 = sphi 0, %s287
      %s288 = sphi 0, %s285
      %s289 = sphi 0, %s288
      %s305 = sphi 0, %s289
    $region4: #{esanet_forward.1} parent=1 // loop_header_branch
      %19 = sbr.rel (%p17) target = $region8
    $region5: #{esanet_forward.1} parent=1 // loop_body
      %s21 = ssub.s32 %s16, 1
      %s22 = ssub.s32 %s16, 2
      %s32 = sadd.s32 1, %s25
      %p33 = scmp.ge.s32.totalorder %s32, 1
      %s34 = scalar_select %p33, 0, %s32
      %s35 = sadd.s32 1, %s24
      %s36 = scalar_select %p33, %s35, %s24
      %p37 = scmp.ge.s32.totalorder %s36, 2
      %s38 = scalar_select %p37, 0, %s36
      %s39 = sadd.s32 1, %s23
      %s40 = scalar_select %p37, %s39, %s23
      %p41 = scmp.ge.s32.totalorder %s40, 2
      %s42 = scalar_select %p41, 0, %s40
      %s43 = ssub.s32 1, %s24
      %s44 = smul.u32 %s25, %s43
      %s45 = ssub.s32 1, %s38
      %s46 = smul.u32 %s34, %s45
      %s47 = ssub.s32 %s23, %s42
      %s48 = ssub.s32 %s44, %s46
      %s49 = sor.u32 %s47, %s48
      %p50 = scmp.eq.s32.totalorder %s49, 0
      %s52 = sadd.s32 %s51, 1
      %s53 = scalar_select %p50, %s51, %s52
      %p56 = pneg %p50
      %p57 = scmp.eq.s32.totalorder %s16, 3
      %p58 = por %p56, %p57
      %p59 = scmp.ne.s32.totalorder %s51, %s54
      %p60 = scmp.eq.s32.totalorder %s16, 0
      %p61 = por %p59, %p60
      %p62 = scmp.ne.s32.totalorder %s51, %s54
      %p63 = scmp.eq.s32.totalorder %s21, 3
      %p64 = por %p62, %p63
      %p65 = scmp.ne.s32.totalorder %s54, %s55
      %p66 = scmp.eq.s32.totalorder %s21, 0
      %p67 = por %p65, %p66
      %p68 = scmp.ne.s32.totalorder %s54, %s55
      %p69 = scmp.eq.s32.totalorder %s22, 3
      %p70 = por %p68, %p69
      %p72 = scmp.ne.s32.totalorder %s55, %s71
      %p73 = scmp.eq.s32.totalorder %s22, 0
      %p74 = por %p72, %p73
      %s75 = ssub.s32 1, %s24
      %s76 = smul.u32 %s25, %s75
      %s77 = sadd.s32 %s76, 1
      %s78 = smul.u32 %s77, 2
      %s79 = ssub.s32 1, %s38
      %s80 = smul.u32 %s34, %s79
      %s81 = sadd.s32 %s80, 1
      %s82 = smul.u32 %s81, 2
      %s83 = ssub.s32 %s23, %s42
      %s84 = ssub.s32 %s78, %s82
      %s85 = sor.u32 %s83, %s84
      %p86 = scmp.eq.s32.totalorder %s85, 0
      %s88 = sadd.s32 %s87, 1
      %s89 = scalar_select %p86, %s87, %s88
      %p92 = pneg %p86
      %p93 = scmp.eq.s32.totalorder %s16, 3
      %p94 = por %p92, %p93
      %p95 = scmp.ne.s32.totalorder %s87, %s90
      %p96 = scmp.eq.s32.totalorder %s16, 0
      %p97 = por %p95, %p96
      %p98 = scmp.ne.s32.totalorder %s87, %s90
      %p99 = scmp.eq.s32.totalorder %s21, 3
      %p100 = por %p98, %p99
      %p101 = scmp.ne.s32.totalorder %s90, %s91
      %p102 = scmp.eq.s32.totalorder %s21, 0
      %p103 = por %p101, %p102
      %p104 = scmp.ne.s32.totalorder %s90, %s91
      %p105 = scmp.eq.s32.totalorder %s22, 3
      %p106 = por %p104, %p105
      %p108 = scmp.ne.s32.totalorder %s91, %s107
      %p109 = scmp.eq.s32.totalorder %s22, 0
      %p110 = por %p108, %p109
      %s112 = sadd.s32 %s111, 1
      %p115 = scmp.eq.s32.totalorder %s16, 3
      %p116 = scmp.ne.s32.totalorder %s111, %s113
      %p117 = scmp.eq.s32.totalorder %s16, 0
      %p118 = por %p116, %p117
      %p119 = scmp.ne.s32.totalorder %s111, %s113
      %p120 = scmp.eq.s32.totalorder %s21, 3
      %p121 = por %p119, %p120
      %p122 = scmp.ne.s32.totalorder %s113, %s114
      %p123 = scmp.eq.s32.totalorder %s21, 0
      %p124 = por %p122, %p123
      %p125 = scmp.ne.s32.totalorder %s113, %s114
      %p126 = scmp.eq.s32.totalorder %s22, 3
      %p127 = por %p125, %p126
      %p129 = scmp.ne.s32.totalorder %s114, %s128
      %p130 = scmp.eq.s32.totalorder %s22, 0
      %p131 = por %p129, %p130
      %s133 = sadd.s32 %s132, 1
      %p136 = scmp.eq.s32.totalorder %s16, 3
      %p137 = scmp.ne.s32.totalorder %s132, %s134
      %p138 = scmp.eq.s32.totalorder %s16, 0
      %p139 = por %p137, %p138
      %p140 = scmp.ne.s32.totalorder %s132, %s134
      %p141 = scmp.eq.s32.totalorder %s21, 3
      %p142 = por %p140, %p141
      %p143 = scmp.ne.s32.totalorder %s134, %s135
      %p144 = scmp.eq.s32.totalorder %s21, 0
      %p145 = por %p143, %p144
      %p146 = scmp.ne.s32.totalorder %s134, %s135
      %p147 = scmp.eq.s32.totalorder %s22, 3
      %p148 = por %p146, %p147
      %p150 = scmp.ne.s32.totalorder %s135, %s149
      %p151 = scmp.eq.s32.totalorder %s22, 0
      %p152 = por %p150, %p151
      %s154 = sadd.s32 %s153, 1
      %p157 = scmp.eq.s32.totalorder %s16, 3
      %p158 = scmp.ne.s32.totalorder %s153, %s155
      %p159 = scmp.eq.s32.totalorder %s16, 0
      %p160 = por %p158, %p159
      %p161 = scmp.ne.s32.totalorder %s153, %s155
      %p162 = scmp.eq.s32.totalorder %s21, 3
      %p163 = por %p161, %p162
      %p164 = scmp.ne.s32.totalorder %s155, %s156
      %p165 = scmp.eq.s32.totalorder %s21, 0
      %p166 = por %p164, %p165
      %p167 = scmp.ne.s32.totalorder %s155, %s156
      %p168 = scmp.eq.s32.totalorder %s22, 3
      %p169 = por %p167, %p168
      %p171 = scmp.ne.s32.totalorder %s156, %s170
      %p172 = scmp.eq.s32.totalorder %s22, 0
      %p173 = por %p171, %p172
      %s175 = sadd.s32 %s174, 1
      %p178 = scmp.eq.s32.totalorder %s16, 3
      %p179 = scmp.ne.s32.totalorder %s174, %s176
      %p180 = scmp.eq.s32.totalorder %s16, 0
      %p181 = por %p179, %p180
      %p182 = scmp.ne.s32.totalorder %s174, %s176
      %p183 = scmp.eq.s32.totalorder %s21, 3
      %p184 = por %p182, %p183
      %p185 = scmp.ne.s32.totalorder %s176, %s177
      %p186 = scmp.eq.s32.totalorder %s21, 0
      %p187 = por %p185, %p186
      %p188 = scmp.ne.s32.totalorder %s176, %s177
      %p189 = scmp.eq.s32.totalorder %s22, 3
      %p190 = por %p188, %p189
      %p192 = scmp.ne.s32.totalorder %s177, %s191
      %p193 = scmp.eq.s32.totalorder %s22, 0
      %p194 = por %p192, %p193
      %s196 = sadd.s32 %s195, 1
      %p199 = scmp.eq.s32.totalorder %s16, 3
      %p200 = scmp.ne.s32.totalorder %s195, %s197
      %p201 = scmp.eq.s32.totalorder %s16, 0
      %p202 = por %p200, %p201
      %p203 = scmp.ne.s32.totalorder %s195, %s197
      %p204 = scmp.eq.s32.totalorder %s21, 3
      %p205 = por %p203, %p204
      %p206 = scmp.ne.s32.totalorder %s197, %s198
      %p207 = scmp.eq.s32.totalorder %s21, 0
      %p208 = por %p206, %p207
      %p209 = scmp.ne.s32.totalorder %s197, %s198
      %p210 = scmp.eq.s32.totalorder %s22, 3
      %p211 = por %p209, %p210
      %p213 = scmp.ne.s32.totalorder %s198, %s212
      %p214 = scmp.eq.s32.totalorder %s22, 0
      %p215 = por %p213, %p214
      %s217 = sadd.s32 %s216, 1
      %p220 = scmp.eq.s32.totalorder %s16, 3
      %p221 = scmp.ne.s32.totalorder %s216, %s218
      %p222 = scmp.eq.s32.totalorder %s16, 0
      %p223 = por %p221, %p222
      %p224 = scmp.ne.s32.totalorder %s216, %s218
      %p225 = scmp.eq.s32.totalorder %s21, 3
      %p226 = por %p224, %p225
      %p227 = scmp.ne.s32.totalorder %s218, %s219
      %p228 = scmp.eq.s32.totalorder %s21, 0
      %p229 = por %p227, %p228
      %p230 = scmp.ne.s32.totalorder %s218, %s219
      %p231 = scmp.eq.s32.totalorder %s22, 3
      %p232 = por %p230, %p231
      %p234 = scmp.ne.s32.totalorder %s219, %s233
      %p235 = scmp.eq.s32.totalorder %s22, 0
      %p236 = por %p234, %p235
      %s238 = sadd.s32 %s237, 1
      %p241 = scmp.eq.s32.totalorder %s16, 3
      %p242 = scmp.ne.s32.totalorder %s237, %s239
      %p243 = scmp.eq.s32.totalorder %s16, 0
      %p244 = por %p242, %p243
      %p245 = scmp.ne.s32.totalorder %s237, %s239
      %p246 = scmp.eq.s32.totalorder %s21, 3
      %p247 = por %p245, %p246
      %p248 = scmp.ne.s32.totalorder %s239, %s240
      %p249 = scmp.eq.s32.totalorder %s21, 0
      %p250 = por %p248, %p249
      %p251 = scmp.ne.s32.totalorder %s239, %s240
      %p252 = scmp.eq.s32.totalorder %s22, 3
      %p253 = por %p251, %p252
      %p255 = scmp.ne.s32.totalorder %s240, %s254
      %p256 = scmp.eq.s32.totalorder %s22, 0
      %p257 = por %p255, %p256
      %s259 = sadd.s32 %s258, 1
      %p262 = scmp.eq.s32.totalorder %s16, 3
      %p263 = scmp.ne.s32.totalorder %s258, %s260
      %p264 = scmp.eq.s32.totalorder %s16, 0
      %p265 = por %p263, %p264
      %p266 = scmp.ne.s32.totalorder %s258, %s260
      %p267 = scmp.eq.s32.totalorder %s21, 3
      %p268 = por %p266, %p267
      %p269 = scmp.ne.s32.totalorder %s260, %s261
      %p270 = scmp.eq.s32.totalorder %s21, 0
      %p271 = por %p269, %p270
      %p272 = scmp.ne.s32.totalorder %s260, %s261
      %p273 = scmp.eq.s32.totalorder %s22, 3
      %p274 = por %p272, %p273
      %p276 = scmp.ne.s32.totalorder %s261, %s275
      %p277 = scmp.eq.s32.totalorder %s22, 0
      %p278 = por %p276, %p277
      %s279 = smul.u32 %s25, %s24
      %s280 = smul.u32 %s34, %s38
      %s281 = ssub.s32 %s23, %s42
      %s282 = ssub.s32 %s279, %s280
      %s283 = sor.u32 %s281, %s282
      %p284 = scmp.eq.s32.totalorder %s283, 0
      %s286 = sadd.s32 %s285, 1
      %s287 = scalar_select %p284, %s285, %s286
      %p290 = pneg %p284
      %p291 = scmp.eq.s32.totalorder %s16, 3
      %p292 = por %p290, %p291
      %p293 = scmp.ne.s32.totalorder %s285, %s288
      %p294 = scmp.eq.s32.totalorder %s16, 0
      %p295 = por %p293, %p294
      %p296 = scmp.ne.s32.totalorder %s285, %s288
      %p297 = scmp.eq.s32.totalorder %s21, 3
      %p298 = por %p296, %p297
      %p299 = scmp.ne.s32.totalorder %s288, %s289
      %p300 = scmp.eq.s32.totalorder %s21, 0
      %p301 = por %p299, %p300
      %p302 = scmp.ne.s32.totalorder %s288, %s289
      %p303 = scmp.eq.s32.totalorder %s22, 3
      %p304 = por %p302, %p303
      %p306 = scmp.ne.s32.totalorder %s289, %s305
      %p307 = scmp.eq.s32.totalorder %s22, 0
      %p308 = por %p306, %p307
      %p309 = scmp.le.s32.totalorder 1, %s16
      %p310 = scmp.lt.s32.totalorder %s16, 5
      %p311 = pnand %p309, %p310
      %p312 = pneg %p311
      // Predicated region
      $region9: #{esanet_forward.1} parent=5 // pred_check
        _
      $region10: #{esanet_forward.1} parent=5 // pred_check_branch
        %314 = sbr.rel (%p311) target = $region12
      $region11: #{esanet_forward.1} parent=5 // pred_region
        %s315 = ssub.s32 %s16, 1
        // Predicated region
        $region13: #{esanet_forward.1} parent=11 // pred_check
          %p316 = pneg %p124
        $region14: #{esanet_forward.1} parent=11 // pred_check_branch
          %318 = sbr.rel (%p316) target = $region16
        $region15: #{esanet_forward.1} parent=11 // pred_region
          _
        $region16: #{esanet_forward.1} parent=11 // pred_fallthru
          _
        // Predicated region
        $region17: #{esanet_forward.1} parent=11 // pred_check
          %p319 = pneg %p145
        $region18: #{esanet_forward.1} parent=11 // pred_check_branch
          %321 = sbr.rel (%p319) target = $region20
        $region19: #{esanet_forward.1} parent=11 // pred_region
          _
        $region20: #{esanet_forward.1} parent=11 // pred_fallthru
          _
        // Predicated region
        $region21: #{esanet_forward.1} parent=11 // pred_check
          %p322 = pneg %p166
        $region22: #{esanet_forward.1} parent=11 // pred_check_branch
          %324 = sbr.rel (%p322) target = $region24
        $region23: #{esanet_forward.1} parent=11 // pred_region
          _
        $region24: #{esanet_forward.1} parent=11 // pred_fallthru
          _
        // Predicated region
        $region25: #{esanet_forward.1} parent=11 // pred_check
          %p325 = pneg %p187
        $region26: #{esanet_forward.1} parent=11 // pred_check_branch
          %327 = sbr.rel (%p325) target = $region28
        $region27: #{esanet_forward.1} parent=11 // pred_region
          _
        $region28: #{esanet_forward.1} parent=11 // pred_fallthru
          _
        // Predicated region
        $region29: #{esanet_forward.1} parent=11 // pred_check
          %p328 = pneg %p208
        $region30: #{esanet_forward.1} parent=11 // pred_check_branch
          %330 = sbr.rel (%p328) target = $region32
        $region31: #{esanet_forward.1} parent=11 // pred_region
          _
        $region32: #{esanet_forward.1} parent=11 // pred_fallthru
          _
        // Predicated region
        $region33: #{esanet_forward.1} parent=11 // pred_check
          %p331 = pneg %p229
        $region34: #{esanet_forward.1} parent=11 // pred_check_branch
          %333 = sbr.rel (%p331) target = $region36
        $region35: #{esanet_forward.1} parent=11 // pred_region
          _
        $region36: #{esanet_forward.1} parent=11 // pred_fallthru
          _
        // Predicated region
        $region37: #{esanet_forward.1} parent=11 // pred_check
          %p334 = pneg %p250
        $region38: #{esanet_forward.1} parent=11 // pred_check_branch
          %336 = sbr.rel (%p334) target = $region40
        $region39: #{esanet_forward.1} parent=11 // pred_region
          _
        $region40: #{esanet_forward.1} parent=11 // pred_fallthru
          _
        // Predicated region
        $region41: #{esanet_forward.1} parent=11 // pred_check
          %p337 = pneg %p271
        $region42: #{esanet_forward.1} parent=11 // pred_check_branch
          %339 = sbr.rel (%p337) target = $region44
        $region43: #{esanet_forward.1} parent=11 // pred_region
          _
        $region44: #{esanet_forward.1} parent=11 // pred_fallthru
          _
      $region12: #{esanet_forward.1} parent=5 // pred_fallthru
        _
      %p340 = scmp.lt.s32.totalorder %s16, 4
      // Predicated region
      $region45: #{esanet_forward.1} parent=5 // pred_check
        %p341 = pneg %p340
      $region46: #{esanet_forward.1} parent=5 // pred_check_branch
        %343 = sbr.rel (%p341) target = $region48
      $region47: #{esanet_forward.1} parent=5 // pred_region
        // Predicated region
        $region49: #{esanet_forward.1} parent=47 // pred_check
          %p344 = pneg %p61
        $region50: #{esanet_forward.1} parent=47 // pred_check_branch
          %346 = sbr.rel (%p344) target = $region52
        $region51: #{esanet_forward.1} parent=47 // pred_region
          %s347 = sand.u32 %s51, 1
          %s348 = sand.u32 %s51, 1
          %s349 = smul.addr %s348, 16
          %s350 = scalar_lea.vmem [#allocation5], %s349
          %s351 = ssub.s32 1, %s24
          %s352 = smul.u32 %s25, %s351
          %s353 = smul.u32 2, %s352
          %s354 = ssub.s32 3, %s353
          %p355 = scmp.lt.s32.totalorder %s354, 2
          %s356 = scalar_select %p355, %s354, 2
          %s357 = smul.u32 128, %s356
          %p358 = scmp.ne.s32.totalorder 0, %s357
          %s359 = smul.addr %s23, 6
          %s360 = sadd.s32 %s353, %s359
          %s361 = smul.addr %s360, 4
          %s362 = scalar_lea.vmem %s0, %s361
          %s363 = smul.u32 %s356, 4
          // Predicated region
          $region53: #{esanet_forward.1} parent=51 // pred_check
            %p364 = pneg %p358
          $region54: #{esanet_forward.1} parent=51 // pred_check_branch
            %366 = sbr.rel (%p364) target = $region56
          $region55: #{esanet_forward.1} parent=51 // pred_region
            %p367 = scmp.lt.u32.totalorder %s363, 8
            %p368 = pneg %p367
            // Predicated region
            $region57: #{esanet_forward.1} parent=55 // pred_check
              _
            $region58: #{esanet_forward.1} parent=55 // pred_check_branch
              %370 = sbr.rel (%p367) target = $region60
            $region59: #{esanet_forward.1} parent=55 // pred_region
              %s388 = sand.u32 %s363, 7
              %p389 = scmp.eq.s32.totalorder %s388, 0
              // Predicated region
              $region72: #{esanet_forward.1} parent=59 // pred_check
                %p390 = pneg %p389
              $region73: #{esanet_forward.1} parent=59 // pred_check_branch
                %392 = sbr.rel (%p390) target = $region75
              $region74: #{esanet_forward.1} parent=59 // pred_region
                %s393 = sshrl.u32 %s363, 3
                %s394 = sshrl.u32 %s393, 5
                // While loop
                $region76: #{esanet_forward.1} parent=74 // loop_pre_header
                  _
                $region77: #{esanet_forward.1} parent=74 // loop_header
                  %s398 = sphi 0, %s400
                  %p399 = scmp.ge.s32.totalorder %s398, %s394
                  %s403 = sphi 0, %s536
                  %s404 = sphi %s362, %s539
                  %s405 = sphi %s350, %s540
                $region78: #{esanet_forward.1} parent=74 // loop_header_branch
                  %402 = sbr.rel (%p399) target = $region82
                $region79: #{esanet_forward.1} parent=74 // loop_body
                  %v406 = vld [vmem:[%s404] sm:$0xff]
                  %407 = vst [vmem:[%s405] sm:$0xff] %v406
                  %v408 = vld [vmem:[%s404 + $0x8] sm:$0xff]
                  %409 = vst [vmem:[%s405 + $0x8] sm:$0xff] %v408
                  %v410 = vld [vmem:[%s404 + $0x10] sm:$0xff]
                  %411 = vst [vmem:[%s405 + $0x10] sm:$0xff] %v410
                  %v412 = vld [vmem:[%s404 + $0x18] sm:$0xff]
                  %413 = vst [vmem:[%s405 + $0x18] sm:$0xff] %v412
                  %v414 = vld [vmem:[%s404 + $0x20] sm:$0xff]
                  %415 = vst [vmem:[%s405 + $0x20] sm:$0xff] %v414
                  %v416 = vld [vmem:[%s404 + $0x28] sm:$0xff]
                  %417 = vst [vmem:[%s405 + $0x28] sm:$0xff] %v416
                  %v418 = vld [vmem:[%s404 + $0x30] sm:$0xff]
                  %419 = vst [vmem:[%s405 + $0x30] sm:$0xff] %v418
                  %v420 = vld [vmem:[%s404 + $0x38] sm:$0xff]
                  %421 = vst [vmem:[%s405 + $0x38] sm:$0xff] %v420
                  %v422 = vld [vmem:[%s404 + $0x40] sm:$0xff]
                  %423 = vst [vmem:[%s405 + $0x40] sm:$0xff] %v422
                  %v424 = vld [vmem:[%s404 + $0x48] sm:$0xff]
                  %425 = vst [vmem:[%s405 + $0x48] sm:$0xff] %v424
                  %v426 = vld [vmem:[%s404 + $0x50] sm:$0xff]
                  %427 = vst [vmem:[%s405 + $0x50] sm:$0xff] %v426
                  %v428 = vld [vmem:[%s404 + $0x58] sm:$0xff]
                  %429 = vst [vmem:[%s405 + $0x58] sm:$0xff] %v428
                  %v430 = vld [vmem:[%s404 + $0x60] sm:$0xff]
                  %431 = vst [vmem:[%s405 + $0x60] sm:$0xff] %v430
                  %v432 = vld [vmem:[%s404 + $0x68] sm:$0xff]
                  %433 = vst [vmem:[%s405 + $0x68] sm:$0xff] %v432
                  %v434 = vld [vmem:[%s404 + $0x70] sm:$0xff]
                  %435 = vst [vmem:[%s405 + $0x70] sm:$0xff] %v434
                  %v436 = vld [vmem:[%s404 + $0x78] sm:$0xff]
                  %437 = vst [vmem:[%s405 + $0x78] sm:$0xff] %v436
                  %v438 = vld [vmem:[%s404 + $0x80] sm:$0xff]
                  %439 = vst [vmem:[%s405 + $0x80] sm:$0xff] %v438
                  %v440 = vld [vmem:[%s404 + $0x88] sm:$0xff]
                  %441 = vst [vmem:[%s405 + $0x88] sm:$0xff] %v440
                  %v442 = vld [vmem:[%s404 + $0x90] sm:$0xff]
                  %443 = vst [vmem:[%s405 + $0x90] sm:$0xff] %v442
                  %v444 = vld [vmem:[%s404 + $0x98] sm:$0xff]
                  %445 = vst [vmem:[%s405 + $0x98] sm:$0xff] %v444
                  %v446 = vld [vmem:[%s404 + $0xa0] sm:$0xff]
                  %447 = vst [vmem:[%s405 + $0xa0] sm:$0xff] %v446
                  %v448 = vld [vmem:[%s404 + $0xa8] sm:$0xff]
                  %449 = vst [vmem:[%s405 + $0xa8] sm:$0xff] %v448
                  %v450 = vld [vmem:[%s404 + $0xb0] sm:$0xff]
                  %451 = vst [vmem:[%s405 + $0xb0] sm:$0xff] %v450
                  %v452 = vld [vmem:[%s404 + $0xb8] sm:$0xff]
                  %453 = vst [vmem:[%s405 + $0xb8] sm:$0xff] %v452
                  %v454 = vld [vmem:[%s404 + $0xc0] sm:$0xff]
                  %455 = vst [vmem:[%s405 + $0xc0] sm:$0xff] %v454
                  %v456 = vld [vmem:[%s404 + $0xc8] sm:$0xff]
                  %457 = vst [vmem:[%s405 + $0xc8] sm:$0xff] %v456
                  %v458 = vld [vmem:[%s404 + $0xd0] sm:$0xff]
                  %459 = vst [vmem:[%s405 + $0xd0] sm:$0xff] %v458
                  %v460 = vld [vmem:[%s404 + $0xd8] sm:$0xff]
                  %461 = vst [vmem:[%s405 + $0xd8] sm:$0xff] %v460
                  %v462 = vld [vmem:[%s404 + $0xe0] sm:$0xff]
                  %463 = vst [vmem:[%s405 + $0xe0] sm:$0xff] %v462
                  %v464 = vld [vmem:[%s404 + $0xe8] sm:$0xff]
                  %465 = vst [vmem:[%s405 + $0xe8] sm:$0xff] %v464
                  %v466 = vld [vmem:[%s404 + $0xf0] sm:$0xff]
                  %467 = vst [vmem:[%s405 + $0xf0] sm:$0xff] %v466
                  %v468 = vld [vmem:[%s404 + $0xf8] sm:$0xff]
                  %469 = vst [vmem:[%s405 + $0xf8] sm:$0xff] %v468
                  %v470 = vld [vmem:[%s404 + $0xc] sm:$0xff]
                  %471 = vst [vmem:[%s405 + $0x8] sm:$0xff] %v470
                  %v472 = vld [vmem:[%s404 + $0x14] sm:$0xff]
                  %473 = vst [vmem:[%s405 + $0x10] sm:$0xff] %v472
                  %v474 = vld [vmem:[%s404 + $0x1c] sm:$0xff]
                  %475 = vst [vmem:[%s405 + $0x18] sm:$0xff] %v474
                  %v476 = vld [vmem:[%s404 + $0x24] sm:$0xff]
                  %477 = vst [vmem:[%s405 + $0x20] sm:$0xff] %v476
                  %v478 = vld [vmem:[%s404 + $0x2c] sm:$0xff]
                  %479 = vst [vmem:[%s405 + $0x28] sm:$0xff] %v478
                  %v480 = vld [vmem:[%s404 + $0x34] sm:$0xff]
                  %481 = vst [vmem:[%s405 + $0x30] sm:$0xff] %v480
                  %v482 = vld [vmem:[%s404 + $0x3c] sm:$0xff]
                  %483 = vst [vmem:[%s405 + $0x38] sm:$0xff] %v482
                  %v484 = vld [vmem:[%s404 + $0x44] sm:$0xff]
                  %485 = vst [vmem:[%s405 + $0x40] sm:$0xff] %v484
                  %v486 = vld [vmem:[%s404 + $0x4c] sm:$0xff]
                  %487 = vst [vmem:[%s405 + $0x48] sm:$0xff] %v486
                  %v488 = vld [vmem:[%s404 + $0x54] sm:$0xff]
                  %489 = vst [vmem:[%s405 + $0x50] sm:$0xff] %v488
                  %v490 = vld [vmem:[%s404 + $0x5c] sm:$0xff]
                  %491 = vst [vmem:[%s405 + $0x58] sm:$0xff] %v490
                  %v492 = vld [vmem:[%s404 + $0x64] sm:$0xff]
                  %493 = vst [vmem:[%s405 + $0x60] sm:$0xff] %v492
                  %v494 = vld [vmem:[%s404 + $0x6c] sm:$0xff]
                  %495 = vst [vmem:[%s405 + $0x68] sm:$0xff] %v494
                  %v496 = vld [vmem:[%s404 + $0x74] sm:$0xff]
                  %497 = vst [vmem:[%s405 + $0x70] sm:$0xff] %v496
                  %v498 = vld [vmem:[%s404 + $0x7c] sm:$0xff]
                  %499 = vst [vmem:[%s405 + $0x78] sm:$0xff] %v498
                  %v500 = vld [vmem:[%s404 + $0x84] sm:$0xff]
                  %501 = vst [vmem:[%s405 + $0x80] sm:$0xff] %v500
                  %v502 = vld [vmem:[%s404 + $0x8c] sm:$0xff]
                  %503 = vst [vmem:[%s405 + $0x88] sm:$0xff] %v502
                  %v504 = vld [vmem:[%s404 + $0x94] sm:$0xff]
                  %505 = vst [vmem:[%s405 + $0x90] sm:$0xff] %v504
                  %v506 = vld [vmem:[%s404 + $0x9c] sm:$0xff]
                  %507 = vst [vmem:[%s405 + $0x98] sm:$0xff] %v506
                  %v508 = vld [vmem:[%s404 + $0xa4] sm:$0xff]
                  %509 = vst [vmem:[%s405 + $0xa0] sm:$0xff] %v508
                  %v510 = vld [vmem:[%s404 + $0xac] sm:$0xff]
                  %511 = vst [vmem:[%s405 + $0xa8] sm:$0xff] %v510
                  %v512 = vld [vmem:[%s404 + $0xb4] sm:$0xff]
                  %513 = vst [vmem:[%s405 + $0xb0] sm:$0xff] %v512
                  %v514 = vld [vmem:[%s404 + $0xbc] sm:$0xff]
                  %515 = vst [vmem:[%s405 + $0xb8] sm:$0xff] %v514
                  %v516 = vld [vmem:[%s404 + $0xc4] sm:$0xff]
                  %517 = vst [vmem:[%s405 + $0xc0] sm:$0xff] %v516
                  %v518 = vld [vmem:[%s404 + $0xcc] sm:$0xff]
                  %519 = vst [vmem:[%s405 + $0xc8] sm:$0xff] %v518
                  %v520 = vld [vmem:[%s404 + $0xd4] sm:$0xff]
                  %521 = vst [vmem:[%s405 + $0xd0] sm:$0xff] %v520
                  %v522 = vld [vmem:[%s404 + $0xdc] sm:$0xff]
                  %523 = vst [vmem:[%s405 + $0xd8] sm:$0xff] %v522
                  %v524 = vld [vmem:[%s404 + $0xe4] sm:$0xff]
                  %525 = vst [vmem:[%s405 + $0xe0] sm:$0xff] %v524
                  %v526 = vld [vmem:[%s404 + $0xec] sm:$0xff]
                  %527 = vst [vmem:[%s405 + $0xe8] sm:$0xff] %v526
                  %v528 = vld [vmem:[%s404 + $0xf4] sm:$0xff]
                  %529 = vst [vmem:[%s405 + $0xf0] sm:$0xff] %v528
                  %v530 = vld [vmem:[%s404 + $0xfc] sm:$0xff]
                  %531 = vst [vmem:[%s405 + $0xf8] sm:$0xff] %v530
                  %v532 = vld [vmem:[%s404 + $0x104] sm:$0xff]
                  %533 = vst [vmem:[%s405 + $0x100] sm:$0xff] %v532
                  %s534 = sadd.s32 1, %s403
                  %p535 = scmp.ge.s32.totalorder %s534, %s394
                  %s536 = scalar_select %p535, 0, %s534
                  %s537 = smul.u32 %s536, 256
                  %s538 = smul.u32 %s536, 256
                  %s539 = scalar_lea.vmem %s362, %s537
                  %s540 = scalar_lea.vmem %s350, %s538 [#allocation5]
                $region80: #{esanet_forward.1} parent=74 // loop_footer
                  %s400 = sadd.s32 %s398, 1
                $region81: #{esanet_forward.1} parent=74 // loop_footer_branch
                  %397 = sbr.rel target = $region77
                $region82: #{esanet_forward.1} parent=74 // loop_exit
                  _
                %s541 = sshrl.u32 %s393, 5
                %s542 = sand.u32 %s393, 31
                %s543 = smul.u32 %s541, 32
                %s544 = smul.u32 128, %s543
                %s545 = sshra.s32 %s544, 4
                %s546 = scalar_lea.vmem %s362, %s545
                %s547 = smul.u32 128, %s543
                %s548 = sshra.s32 %s547, 4
                %s549 = scalar_lea.vmem %s350, %s548 [#allocation5]
                // While loop
                $region83: #{esanet_forward.1} parent=74 // loop_pre_header
                  _
                $region84: #{esanet_forward.1} parent=74 // loop_header
                  %s553 = sphi 0, %s555
                  %p554 = scmp.ge.s32.totalorder %s553, %s542
                  %s558 = sphi 0, %s567
                  %s559 = sphi %s546, %s570
                  %s560 = sphi %s549, %s571
                $region85: #{esanet_forward.1} parent=74 // loop_header_branch
                  %557 = sbr.rel (%p554) target = $region89
                $region86: #{esanet_forward.1} parent=74 // loop_body
                  %v561 = vld [vmem:[%s559] sm:$0xff]
                  %562 = vst [vmem:[%s560] sm:$0xff] %v561
                  %v563 = vld [vmem:[%s559 + $0xc] sm:$0xff]
                  %564 = vst [vmem:[%s560 + $0x8] sm:$0xff] %v563
                  %s565 = sadd.s32 1, %s558
                  %p566 = scmp.ge.s32.totalorder %s565, %s542
                  %s567 = scalar_select %p566, 0, %s565
                  %s568 = smul.u32 %s567, 8
                  %s569 = smul.u32 %s567, 8
                  %s570 = scalar_lea.vmem %s546, %s568
                  %s571 = scalar_lea.vmem %s549, %s569 [#allocation5]
                $region87: #{esanet_forward.1} parent=74 // loop_footer
                  %s555 = sadd.s32 %s553, 1
                $region88: #{esanet_forward.1} parent=74 // loop_footer_branch
                  %552 = sbr.rel target = $region84
                $region89: #{esanet_forward.1} parent=74 // loop_exit
                  _
              $region75: #{esanet_forward.1} parent=59 // pred_fallthru
                _
              %p572 = pneg %p389
              // Predicated region
              $region90: #{esanet_forward.1} parent=59 // pred_check
                _
              $region91: #{esanet_forward.1} parent=59 // pred_check_branch
                %574 = sbr.rel (%p389) target = $region93
              $region92: #{esanet_forward.1} parent=59 // pred_region
                %s575 = sand.u32 %s363, 7
                %s576 = ssub.s32 %s363, %s575
                %s577 = scalar_lea.vmem %s362, %s576
                %s578 = ssub.s32 %s363, %s575
                %s579 = scalar_lea.vmem %s350, %s578 [#allocation5]
                %s580 = sshrl.u32 %s363, 3
                %s581 = sshrl.u32 %s580, 5
                // While loop
                $region94: #{esanet_forward.1} parent=92 // loop_pre_header
                  _
                $region95: #{esanet_forward.1} parent=92 // loop_header
                  %s585 = sphi 0, %s587
                  %p586 = scmp.ge.s32.totalorder %s585, %s581
                  %s590 = sphi 0, %s723
                  %s591 = sphi %s362, %s726
                  %s592 = sphi %s350, %s727
                $region96: #{esanet_forward.1} parent=92 // loop_header_branch
                  %589 = sbr.rel (%p586) target = $region100
                $region97: #{esanet_forward.1} parent=92 // loop_body
                  %v593 = vld [vmem:[%s591] sm:$0xff]
                  %594 = vst [vmem:[%s592] sm:$0xff] %v593
                  %v595 = vld [vmem:[%s591 + $0x8] sm:$0xff]
                  %596 = vst [vmem:[%s592 + $0x8] sm:$0xff] %v595
                  %v597 = vld [vmem:[%s591 + $0x10] sm:$0xff]
                  %598 = vst [vmem:[%s592 + $0x10] sm:$0xff] %v597
                  %v599 = vld [vmem:[%s591 + $0x18] sm:$0xff]
                  %600 = vst [vmem:[%s592 + $0x18] sm:$0xff] %v599
                  %v601 = vld [vmem:[%s591 + $0x20] sm:$0xff]
                  %602 = vst [vmem:[%s592 + $0x20] sm:$0xff] %v601
                  %v603 = vld [vmem:[%s591 + $0x28] sm:$0xff]
                  %604 = vst [vmem:[%s592 + $0x28] sm:$0xff] %v603
                  %v605 = vld [vmem:[%s591 + $0x30] sm:$0xff]
                  %606 = vst [vmem:[%s592 + $0x30] sm:$0xff] %v605
                  %v607 = vld [vmem:[%s591 + $0x38] sm:$0xff]
                  %608 = vst [vmem:[%s592 + $0x38] sm:$0xff] %v607
                  %v609 = vld [vmem:[%s591 + $0x40] sm:$0xff]
                  %610 = vst [vmem:[%s592 + $0x40] sm:$0xff] %v609
                  %v611 = vld [vmem:[%s591 + $0x48] sm:$0xff]
                  %612 = vst [vmem:[%s592 + $0x48] sm:$0xff] %v611
                  %v613 = vld [vmem:[%s591 + $0x50] sm:$0xff]
                  %614 = vst [vmem:[%s592 + $0x50] sm:$0xff] %v613
                  %v615 = vld [vmem:[%s591 + $0x58] sm:$0xff]
                  %616 = vst [vmem:[%s592 + $0x58] sm:$0xff] %v615
                  %v617 = vld [vmem:[%s591 + $0x60] sm:$0xff]
                  %618 = vst [vmem:[%s592 + $0x60] sm:$0xff] %v617
                  %v619 = vld [vmem:[%s591 + $0x68] sm:$0xff]
                  %620 = vst [vmem:[%s592 + $0x68] sm:$0xff] %v619
                  %v621 = vld [vmem:[%s591 + $0x70] sm:$0xff]
                  %622 = vst [vmem:[%s592 + $0x70] sm:$0xff] %v621
                  %v623 = vld [vmem:[%s591 + $0x78] sm:$0xff]
                  %624 = vst [vmem:[%s592 + $0x78] sm:$0xff] %v623
                  %v625 = vld [vmem:[%s591 + $0x80] sm:$0xff]
                  %626 = vst [vmem:[%s592 + $0x80] sm:$0xff] %v625
                  %v627 = vld [vmem:[%s591 + $0x88] sm:$0xff]
                  %628 = vst [vmem:[%s592 + $0x88] sm:$0xff] %v627
                  %v629 = vld [vmem:[%s591 + $0x90] sm:$0xff]
                  %630 = vst [vmem:[%s592 + $0x90] sm:$0xff] %v629
                  %v631 = vld [vmem:[%s591 + $0x98] sm:$0xff]
                  %632 = vst [vmem:[%s592 + $0x98] sm:$0xff] %v631
                  %v633 = vld [vmem:[%s591 + $0xa0] sm:$0xff]
                  %634 = vst [vmem:[%s592 + $0xa0] sm:$0xff] %v633
                  %v635 = vld [vmem:[%s591 + $0xa8] sm:$0xff]
                  %636 = vst [vmem:[%s592 + $0xa8] sm:$0xff] %v635
                  %v637 = vld [vmem:[%s591 + $0xb0] sm:$0xff]
                  %638 = vst [vmem:[%s592 + $0xb0] sm:$0xff] %v637
                  %v639 = vld [vmem:[%s591 + $0xb8] sm:$0xff]
                  %640 = vst [vmem:[%s592 + $0xb8] sm:$0xff] %v639
                  %v641 = vld [vmem:[%s591 + $0xc0] sm:$0xff]
                  %642 = vst [vmem:[%s592 + $0xc0] sm:$0xff] %v641
                  %v643 = vld [vmem:[%s591 + $0xc8] sm:$0xff]
                  %644 = vst [vmem:[%s592 + $0xc8] sm:$0xff] %v643
                  %v645 = vld [vmem:[%s591 + $0xd0] sm:$0xff]
                  %646 = vst [vmem:[%s592 + $0xd0] sm:$0xff] %v645
                  %v647 = vld [vmem:[%s591 + $0xd8] sm:$0xff]
                  %648 = vst [vmem:[%s592 + $0xd8] sm:$0xff] %v647
                  %v649 = vld [vmem:[%s591 + $0xe0] sm:$0xff]
                  %650 = vst [vmem:[%s592 + $0xe0] sm:$0xff] %v649
                  %v651 = vld [vmem:[%s591 + $0xe8] sm:$0xff]
                  %652 = vst [vmem:[%s592 + $0xe8] sm:$0xff] %v651
                  %v653 = vld [vmem:[%s591 + $0xf0] sm:$0xff]
                  %654 = vst [vmem:[%s592 + $0xf0] sm:$0xff] %v653
                  %v655 = vld [vmem:[%s591 + $0xf8] sm:$0xff]
                  %656 = vst [vmem:[%s592 + $0xf8] sm:$0xff] %v655
                  %v657 = vld [vmem:[%s591 + $0xc] sm:$0xff]
                  %658 = vst [vmem:[%s592 + $0x8] sm:$0xff] %v657
                  %v659 = vld [vmem:[%s591 + $0x14] sm:$0xff]
                  %660 = vst [vmem:[%s592 + $0x10] sm:$0xff] %v659
                  %v661 = vld [vmem:[%s591 + $0x1c] sm:$0xff]
                  %662 = vst [vmem:[%s592 + $0x18] sm:$0xff] %v661
                  %v663 = vld [vmem:[%s591 + $0x24] sm:$0xff]
                  %664 = vst [vmem:[%s592 + $0x20] sm:$0xff] %v663
                  %v665 = vld [vmem:[%s591 + $0x2c] sm:$0xff]
                  %666 = vst [vmem:[%s592 + $0x28] sm:$0xff] %v665
                  %v667 = vld [vmem:[%s591 + $0x34] sm:$0xff]
                  %668 = vst [vmem:[%s592 + $0x30] sm:$0xff] %v667
                  %v669 = vld [vmem:[%s591 + $0x3c] sm:$0xff]
                  %670 = vst [vmem:[%s592 + $0x38] sm:$0xff] %v669
                  %v671 = vld [vmem:[%s591 + $0x44] sm:$0xff]
                  %672 = vst [vmem:[%s592 + $0x40] sm:$0xff] %v671
                  %v673 = vld [vmem:[%s591 + $0x4c] sm:$0xff]
                  %674 = vst [vmem:[%s592 + $0x48] sm:$0xff] %v673
                  %v675 = vld [vmem:[%s591 + $0x54] sm:$0xff]
                  %676 = vst [vmem:[%s592 + $0x50] sm:$0xff] %v675
                  %v677 = vld [vmem:[%s591 + $0x5c] sm:$0xff]
                  %678 = vst [vmem:[%s592 + $0x58] sm:$0xff] %v677
                  %v679 = vld [vmem:[%s591 + $0x64] sm:$0xff]
                  %680 = vst [vmem:[%s592 + $0x60] sm:$0xff] %v679
                  %v681 = vld [vmem:[%s591 + $0x6c] sm:$0xff]
                  %682 = vst [vmem:[%s592 + $0x68] sm:$0xff] %v681
                  %v683 = vld [vmem:[%s591 + $0x74] sm:$0xff]
                  %684 = vst [vmem:[%s592 + $0x70] sm:$0xff] %v683
                  %v685 = vld [vmem:[%s591 + $0x7c] sm:$0xff]
                  %686 = vst [vmem:[%s592 + $0x78] sm:$0xff] %v685
                  %v687 = vld [vmem:[%s591 + $0x84] sm:$0xff]
                  %688 = vst [vmem:[%s592 + $0x80] sm:$0xff] %v687
                  %v689 = vld [vmem:[%s591 + $0x8c] sm:$0xff]
                  %690 = vst [vmem:[%s592 + $0x88] sm:$0xff] %v689
                  %v691 = vld [vmem:[%s591 + $0x94] sm:$0xff]
                  %692 = vst [vmem:[%s592 + $0x90] sm:$0xff] %v691
                  %v693 = vld [vmem:[%s591 + $0x9c] sm:$0xff]
                  %694 = vst [vmem:[%s592 + $0x98] sm:$0xff] %v693
                  %v695 = vld [vmem:[%s591 + $0xa4] sm:$0xff]
                  %696 = vst [vmem:[%s592 + $0xa0] sm:$0xff] %v695
                  %v697 = vld [vmem:[%s591 + $0xac] sm:$0xff]
                  %698 = vst [vmem:[%s592 + $0xa8] sm:$0xff] %v697
                  %v699 = vld [vmem:[%s591 + $0xb4] sm:$0xff]
                  %700 = vst [vmem:[%s592 + $0xb0] sm:$0xff] %v699
                  %v701 = vld [vmem:[%s591 + $0xbc] sm:$0xff]
                  %702 = vst [vmem:[%s592 + $0xb8] sm:$0xff] %v701
                  %v703 = vld [vmem:[%s591 + $0xc4] sm:$0xff]
                  %704 = vst [vmem:[%s592 + $0xc0] sm:$0xff] %v703
                  %v705 = vld [vmem:[%s591 + $0xcc] sm:$0xff]
                  %706 = vst [vmem:[%s592 + $0xc8] sm:$0xff] %v705
                  %v707 = vld [vmem:[%s591 + $0xd4] sm:$0xff]
                  %708 = vst [vmem:[%s592 + $0xd0] sm:$0xff] %v707
                  %v709 = vld [vmem:[%s591 + $0xdc] sm:$0xff]
                  %710 = vst [vmem:[%s592 + $0xd8] sm:$0xff] %v709
                  %v711 = vld [vmem:[%s591 + $0xe4] sm:$0xff]
                  %712 = vst [vmem:[%s592 + $0xe0] sm:$0xff] %v711
                  %v713 = vld [vmem:[%s591 + $0xec] sm:$0xff]
                  %714 = vst [vmem:[%s592 + $0xe8] sm:$0xff] %v713
                  %v715 = vld [vmem:[%s591 + $0xf4] sm:$0xff]
                  %716 = vst [vmem:[%s592 + $0xf0] sm:$0xff] %v715
                  %v717 = vld [vmem:[%s591 + $0xfc] sm:$0xff]
                  %718 = vst [vmem:[%s592 + $0xf8] sm:$0xff] %v717
                  %v719 = vld [vmem:[%s591 + $0x104] sm:$0xff]
                  %720 = vst [vmem:[%s592 + $0x100] sm:$0xff] %v719
                  %s721 = sadd.s32 1, %s590
                  %p722 = scmp.ge.s32.totalorder %s721, %s581
                  %s723 = scalar_select %p722, 0, %s721
                  %s724 = smul.u32 %s723, 256
                  %s725 = smul.u32 %s723, 256
                  %s726 = scalar_lea.vmem %s362, %s724
                  %s727 = scalar_lea.vmem %s350, %s725 [#allocation5]
                $region98: #{esanet_forward.1} parent=92 // loop_footer
                  %s587 = sadd.s32 %s585, 1
                $region99: #{esanet_forward.1} parent=92 // loop_footer_branch
                  %584 = sbr.rel target = $region95
                $region100: #{esanet_forward.1} parent=92 // loop_exit
                  _
                %s728 = sshrl.u32 %s580, 5
                %s729 = sand.u32 %s580, 31
                %s730 = smul.u32 %s728, 32
                %s731 = smul.u32 128, %s730
                %s732 = sshra.s32 %s731, 4
                %s733 = scalar_lea.vmem %s362, %s732
                %s734 = smul.u32 128, %s730
                %s735 = sshra.s32 %s734, 4
                %s736 = scalar_lea.vmem %s350, %s735 [#allocation5]
                // While loop
                $region101: #{esanet_forward.1} parent=92 // loop_pre_header
                  _
                $region102: #{esanet_forward.1} parent=92 // loop_header
                  %s740 = sphi 0, %s742
                  %p741 = scmp.ge.s32.totalorder %s740, %s729
                  %s745 = sphi 0, %s754
                  %s746 = sphi %s733, %s757
                  %s747 = sphi %s736, %s758
                $region103: #{esanet_forward.1} parent=92 // loop_header_branch
                  %744 = sbr.rel (%p741) target = $region107
                $region104: #{esanet_forward.1} parent=92 // loop_body
                  %v748 = vld [vmem:[%s746] sm:$0xff]
                  %749 = vst [vmem:[%s747] sm:$0xff] %v748
                  %v750 = vld [vmem:[%s746 + $0xc] sm:$0xff]
                  %751 = vst [vmem:[%s747 + $0x8] sm:$0xff] %v750
                  %s752 = sadd.s32 1, %s745
                  %p753 = scmp.ge.s32.totalorder %s752, %s729
                  %s754 = scalar_select %p753, 0, %s752
                  %s755 = smul.u32 %s754, 8
                  %s756 = smul.u32 %s754, 8
                  %s757 = scalar_lea.vmem %s733, %s755
                  %s758 = scalar_lea.vmem %s736, %s756 [#allocation5]
                $region105: #{esanet_forward.1} parent=92 // loop_footer
                  %s742 = sadd.s32 %s740, 1
                $region106: #{esanet_forward.1} parent=92 // loop_footer_branch
                  %739 = sbr.rel target = $region102
                $region107: #{esanet_forward.1} parent=92 // loop_exit
                  _
                %s759 = sshll.u32 1, %s575
                %s760 = ssub.s32 %s759, 1
                loop: start=0, step=1, limit=1
                $region108: #{esanet_forward.1} parent=92 // loop_pre_header
                  _
                $region109: #{esanet_forward.1} parent=92 // loop_header
                  %s762 = sphi 0, %s766
                  %p763 = scmp.ge.s32.totalorder %s762, 1
                  %s767 = sphi %s577, %s577
                  %s768 = sphi %s579, %s579
                $region110: #{esanet_forward.1} parent=92 // loop_header_branch
                  %765 = sbr.rel (%p763) target = $region114
                $region111: #{esanet_forward.1} parent=92 // loop_body
                  %v769 = vld [vmem:[%s767] sm:%s760]
                  %770 = vst [vmem:[%s768] sm:%s760] %v769
                  %v771 = vld [vmem:[%s767 + $0xc] sm:%s760]
                  %772 = vst [vmem:[%s768 + $0x8] sm:%s760] %v771
                $region112: #{esanet_forward.1} parent=92 // loop_footer
                  %s766 = sadd.s32 1, %s762
                $region113: #{esanet_forward.1} parent=92 // loop_footer_branch
                  %761 = sbr.rel target = $region109
                $region114: #{esanet_forward.1} parent=92 // loop_exit
                  _
              $region93: #{esanet_forward.1} parent=59 // pred_fallthru
                _
            $region60: #{esanet_forward.1} parent=55 // pred_fallthru
              _
            // Predicated region
            $region61: #{esanet_forward.1} parent=55 // pred_check
              %p371 = pneg %p367
            $region62: #{esanet_forward.1} parent=55 // pred_check_branch
              %373 = sbr.rel (%p371) target = $region64
            $region63: #{esanet_forward.1} parent=55 // pred_region
              %s374 = sshll.u32 1, %s363
              %s375 = ssub.s32 %s374, 1
              loop: start=0, step=1, limit=1
              $region65: #{esanet_forward.1} parent=63 // loop_pre_header
                _
              $region66: #{esanet_forward.1} parent=63 // loop_header
                %s377 = sphi 0, %s381
                %p378 = scmp.ge.s32.totalorder %s377, 1
                %s382 = sphi %s362, %s362
                %s383 = sphi %s350, %s350
              $region67: #{esanet_forward.1} parent=63 // loop_header_branch
                %380 = sbr.rel (%p378) target = $region71
              $region68: #{esanet_forward.1} parent=63 // loop_body
                %v384 = vld [vmem:[%s382] sm:%s375]
                %385 = vst [vmem:[%s383] sm:%s375] %v384
                %v386 = vld [vmem:[%s382 + $0xc] sm:%s375]
                %387 = vst [vmem:[%s383 + $0x8] sm:%s375] %v386
              $region69: #{esanet_forward.1} parent=63 // loop_footer
                %s381 = sadd.s32 1, %s377
              $region70: #{esanet_forward.1} parent=63 // loop_footer_branch
                %376 = sbr.rel target = $region66
              $region71: #{esanet_forward.1} parent=63 // loop_exit
                _
            $region64: #{esanet_forward.1} parent=55 // pred_fallthru
              _
          $region56: #{esanet_forward.1} parent=51 // pred_fallthru
            _
          %773 = vnop
        $region52: #{esanet_forward.1} parent=47 // pred_fallthru
          _
        // Predicated region
        $region115: #{esanet_forward.1} parent=47 // pred_check
          %p774 = pneg %p97
        $region116: #{esanet_forward.1} parent=47 // pred_check_branch
          %776 = sbr.rel (%p774) target = $region118
        $region117: #{esanet_forward.1} parent=47 // pred_region
          %s777 = sand.u32 %s87, 1
          %s778 = sand.u32 %s87, 1
          %s779 = smul.addr %s778, 8
          %s780 = scalar_lea.vmem [#allocation6], %s779
          %s781 = ssub.s32 1, %s24
          %s782 = smul.u32 %s25, %s781
          %s783 = sadd.s32 %s782, 1
          %s784 = smul.u32 %s783, 2
          %s785 = smul.addr %s23, 6
          %s786 = sadd.s32 %s784, %s785
          %s787 = smul.addr %s786, 4
          %s788 = scalar_lea.vmem %s1, %s787
          // Predicated region
          $region119: #{esanet_forward.1} parent=117 // pred_check
            _
          $region120: #{esanet_forward.1} parent=117 // pred_check_branch
            %790 = sbr.rel (0) target = $region122
          $region121: #{esanet_forward.1} parent=117 // pred_region
            // Predicated region
            $region123: #{esanet_forward.1} parent=121 // pred_check
              _
            $region124: #{esanet_forward.1} parent=121 // pred_check_branch
              %792 = sbr.rel target = $region126
            $region125: #{esanet_forward.1} parent=121 // pred_region
              // Predicated region
              $region138: #{esanet_forward.1} parent=125 // pred_check
                _
              $region139: #{esanet_forward.1} parent=125 // pred_check_branch
                %810 = sbr.rel (0) target = $region141
              $region140: #{esanet_forward.1} parent=125 // pred_region
                loop: start=0, step=1, limit=1
                $region142: #{esanet_forward.1} parent=140 // loop_pre_header
                  _
                $region143: #{esanet_forward.1} parent=140 // loop_header
                  %s812 = sphi 0, %s816
                  %p813 = scmp.ge.s32.totalorder %s812, 1
                  %s817 = sphi %s788, %s788
                  %s818 = sphi %s780, %s780
                $region144: #{esanet_forward.1} parent=140 // loop_header_branch
                  %815 = sbr.rel (%p813) target = $region148
                $region145: #{esanet_forward.1} parent=140 // loop_body
                  _
                $region146: #{esanet_forward.1} parent=140 // loop_footer
                  %s816 = sadd.s32 1, %s812
                $region147: #{esanet_forward.1} parent=140 // loop_footer_branch
                  %811 = sbr.rel target = $region143
                $region148: #{esanet_forward.1} parent=140 // loop_exit
                  _
                %s820 = ssub.s32 16, 1
                loop: start=0, step=1, limit=1
                $region149: #{esanet_forward.1} parent=140 // loop_pre_header
                  _
                $region150: #{esanet_forward.1} parent=140 // loop_header
                  %s822 = sphi 0, %s826
                  %p823 = scmp.ge.s32.totalorder %s822, 1
                  %s827 = sphi %s788, %s788
                  %s828 = sphi %s780, %s780
                $region151: #{esanet_forward.1} parent=140 // loop_header_branch
                  %825 = sbr.rel (%p823) target = $region155
                $region152: #{esanet_forward.1} parent=140 // loop_body
                  %v829 = vld [vmem:[%s827] sm:%s820]
                  %830 = vst [vmem:[%s828] sm:%s820] %v829
                  %v831 = vld [vmem:[%s827 + $0xc] sm:%s820]
                  %832 = vst [vmem:[%s828 + $0x4] sm:%s820] %v831
                $region153: #{esanet_forward.1} parent=140 // loop_footer
                  %s826 = sadd.s32 1, %s822
                $region154: #{esanet_forward.1} parent=140 // loop_footer_branch
                  %821 = sbr.rel target = $region150
                $region155: #{esanet_forward.1} parent=140 // loop_exit
                  _
              $region141: #{esanet_forward.1} parent=125 // pred_fallthru
                _
            $region126: #{esanet_forward.1} parent=121 // pred_fallthru
              _
            // Predicated region
            $region127: #{esanet_forward.1} parent=121 // pred_check
              _
            $region128: #{esanet_forward.1} parent=121 // pred_check_branch
              %794 = sbr.rel (0) target = $region130
            $region129: #{esanet_forward.1} parent=121 // pred_region
              %s796 = ssub.s32 16, 1
              loop: start=0, step=1, limit=1
              $region131: #{esanet_forward.1} parent=129 // loop_pre_header
                _
              $region132: #{esanet_forward.1} parent=129 // loop_header
                %s798 = sphi 0, %s802
                %p799 = scmp.ge.s32.totalorder %s798, 1
                %s803 = sphi %s788, %s788
                %s804 = sphi %s780, %s780
              $region133: #{esanet_forward.1} parent=129 // loop_header_branch
                %801 = sbr.rel (%p799) target = $region137
              $region134: #{esanet_forward.1} parent=129 // loop_body
                %v805 = vld [vmem:[%s803] sm:%s796]
                %806 = vst [vmem:[%s804] sm:%s796] %v805
                %v807 = vld [vmem:[%s803 + $0xc] sm:%s796]
                %808 = vst [vmem:[%s804 + $0x4] sm:%s796] %v807
              $region135: #{esanet_forward.1} parent=129 // loop_footer
                %s802 = sadd.s32 1, %s798
              $region136: #{esanet_forward.1} parent=129 // loop_footer_branch
                %797 = sbr.rel target = $region132
              $region137: #{esanet_forward.1} parent=129 // loop_exit
                _
            $region130: #{esanet_forward.1} parent=121 // pred_fallthru
              _
          $region122: #{esanet_forward.1} parent=117 // pred_fallthru
            _
          %833 = vnop
        $region118: #{esanet_forward.1} parent=47 // pred_fallthru
          _
      $region48: #{esanet_forward.1} parent=5 // pred_fallthru
        _
      %p834 = scmp.le.s32.totalorder 1, %s16
      %p835 = scmp.lt.s32.totalorder %s16, 5
      %p836 = pnand %p834, %p835
      %p837 = pneg %p836
      // Predicated region
      $region156: #{esanet_forward.1} parent=5 // pred_check
        _
      $region157: #{esanet_forward.1} parent=5 // pred_check_branch
        %839 = sbr.rel (%p836) target = $region159
      $region158: #{esanet_forward.1} parent=5 // pred_region
        %s840 = ssub.s32 %s16, 1
        %s841 = sand.u32 %s54, 1
        %s842 = sand.u32 %s54, 1
        %s843 = smul.addr %s842, 16
        %s844 = scalar_lea.vmem [#allocation5], %s843
        // Predicated region
        $region160: #{esanet_forward.1} parent=158 // pred_check
          %p845 = pneg %p67
        $region161: #{esanet_forward.1} parent=158 // pred_check_branch
          %847 = sbr.rel (%p845) target = $region163
        $region162: #{esanet_forward.1} parent=158 // pred_region
          _
        $region163: #{esanet_forward.1} parent=158 // pred_fallthru
          _
        %s848 = sand.u32 %s90, 1
        %s849 = sand.u32 %s90, 1
        %s850 = smul.addr %s849, 8
        %s851 = scalar_lea.vmem [#allocation6], %s850
        // Predicated region
        $region164: #{esanet_forward.1} parent=158 // pred_check
          %p852 = pneg %p103
        $region165: #{esanet_forward.1} parent=158 // pred_check_branch
          %854 = sbr.rel (%p852) target = $region167
        $region166: #{esanet_forward.1} parent=158 // pred_region
          _
        $region167: #{esanet_forward.1} parent=158 // pred_fallthru
          _
        %s855 = sand.u32 %s54, 1
        %s856 = sand.u32 %s54, 1
        %s857 = smul.addr %s856, 16
        %s858 = scalar_lea.vmem [#allocation5], %s857
        %p859 = pneg %p67
        %p860 = pneg %p64
        %s861 = sand.u32 %s90, 1
        %s862 = sand.u32 %s90, 1
        %s863 = smul.addr %s862, 8
        %s864 = scalar_lea.vmem [#allocation6], %s863
        %p865 = pneg %p103
        %p866 = pneg %p100
        %p867 = pneg %p124
        %p868 = pneg %p121
        %p869 = pneg %p145
        %p870 = pneg %p142
        %p871 = pneg %p166
        %p872 = pneg %p163
        %p873 = pneg %p187
        %p874 = pneg %p184
        %p875 = pneg %p208
        %p876 = pneg %p205
        %p877 = pneg %p229
        %p878 = pneg %p226
        %p879 = pneg %p250
        %p880 = pneg %p247
        %p881 = pneg %p271
        %p882 = pneg %p268
        %p883 = pneg %p301
        %p884 = pneg %p298
        %s885 = smul.u32 %s28, %s27
        %s886 = smul.u32 2, %s885
        %p887 = scmp.lt.s32.totalorder %s26, 1
        %s888 = scalar_select %p887, %s26, 1
        %p889 = scmp.lt.s32.totalorder %s886, 1
        %s890 = scalar_select %p889, %s886, 1
        %s891 = smul.addr %s888, 2
        %s892 = sadd.s32 %s890, %s891
        %s893 = smul.addr %s892, 8
        %s894 = scalar_lea.vmem %s10, %s893
        %s895 = ssub.s32 1, %s27
        %s896 = smul.u32 %s28, %s895
        %s897 = smul.u32 2, %s896
        %s898 = ssub.s32 3, %s897
        %p899 = scmp.lt.s32.totalorder %s898, 2
        %s900 = scalar_select %p899, %s898, 2
        %s901 = smul.u32 128, %s900
        %s902 = ssub.s32 1, %s27
        %s903 = smul.u32 %s28, %s902
        %s904 = sadd.s32 %s903, 1
        %s905 = smul.u32 %s904, 2
        %s906 = smul.u32 %s28, %s27
        %s907 = smul.u32 2, %s906
        %p908 = scmp.lt.s32.totalorder %s26, 1
        %s909 = scalar_select %p908, %s26, 1
        %p910 = scmp.lt.s32.totalorder %s907, 1
        %s911 = scalar_select %p910, %s907, 1
        %s912 = smul.addr %s909, 2
        %s913 = sadd.s32 %s911, %s912
        %s914 = smul.addr %s913, 8
        %s915 = scalar_lea.vmem %s10, %s914
        %s916 = smul.u32 %s28, %s27
        %s917 = smul.u32 2, %s916
        %p919 = scmp.eq.s32.totalorder %s27, 0
        %p920 = scmp.eq.s32.totalorder %s28, 0
        %p921 = pnand %p919, %p920
        %p922 = pneg %p921
        // Predicated region
        $region168: #{esanet_forward.1} parent=158 // pred_check
          _
        $region169: #{esanet_forward.1} parent=158 // pred_check_branch
          %924 = sbr.rel (%p921) target = $region171
        $region170: #{esanet_forward.1} parent=158 // pred_region
          %vm925 = vcmask 7168
          %926 = vst.msk [vmem:[#allocation2] sm:$0xff] %vm925, 0.0
          %927 = vst.msk [vmem:[#allocation2 + $0x8] sm:$0xff] %vm925, 0.0
          %928 = vst.msk [vmem:[#allocation2 + $0x10] sm:$0xff] %vm925, 0.0
          %929 = vst.msk [vmem:[#allocation2 + $0x18] sm:$0xff] %vm925, 0.0
        $region171: #{esanet_forward.1} parent=158 // pred_fallthru
          _
        // Predicated region
        $region172: #{esanet_forward.1} parent=158 // pred_check
          %p930 = pneg %p919
        $region173: #{esanet_forward.1} parent=158 // pred_check_branch
          %932 = sbr.rel (%p930) target = $region175
        $region174: #{esanet_forward.1} parent=158 // pred_region
          %v933 = vld [vmem:[%s844] sm:$0xff]
          %v934 = vld [vmem:[%s844 + $0x8] sm:$0x33]
          %v935 = vld [vmem:[%s851] sm:$0xf]
          %v936 = vld [vmem:[%s851 + $0x4] sm:$0x3]
          %v939 = vunpack.c.l.b16 %v933
          %v940 = vunpack.c.h.b16 %v933
          %v941 = vunpack.c.l.b16 %v934
          %v942 = vunpack.c.h.b16 %v934
          %v943 = vpack.c.b16 %v941, %v939
          %v944 = vpack.c.b16 %v942, %v940
          %v947 = vunpack.c.l.b16 %v935
          %v948 = vunpack.c.l.b16 %v936
          %v949 = vpack.c.b16 %v948, %v947
          %v950 = vld [vmem:[%s2] sm:$0xf]
          %v951 = vld [vmem:[%s2 + $0x4] sm:$0xf]
          %v952 = vld [vmem:[%s2 + $0x8] sm:$0xf]
          %v953 = vld [vmem:[%s2 + $0xc] sm:$0xf]
          %s954 = scalar_lea.vmem %s2, 16
          %v955 = vld [vmem:[%s954] sm:$0xf]
          %v956 = vld [vmem:[%s954 + $0x4] sm:$0xf]
          %v957 = vld [vmem:[%s954 + $0x8] sm:$0xf]
          %v958 = vld [vmem:[%s954 + $0xc] sm:$0xf]
          %v963 = vunpack.c.l.b16 %v955
          %v964 = vunpack.c.l.b16 %v956
          %v965 = vunpack.c.l.b16 %v957
          %v966 = vunpack.c.l.b16 %v958
          %v967 = vpack.c.b16 %v964, %v963
          %v968 = vpack.c.b16 %v966, %v965
          %969 = vrot.lane.b32.xlu0 %v943, 112
          %v970 = vpop.permute.xlu0 %969
          %971 = vrot.lane.b32.xlu0 %v944, 112
          %v972 = vpop.permute.xlu0 %971
          %973 = vrot.lane.b32.xlu0 %v949, 112
          %v974 = vpop.permute.xlu0 %973
          %vm975 = vcmask 916480
          %v976 = vsel %vm975, %v970, %v972
          %v977 = vsel %vm975, %v972, %v974
          %vm978 = vcmask 97280
          %v980 = vsel %vm978, %v967, 0
          %v983 = vsel %vm978, %v968, 0
          %vm985 = vcmask 1045504
          %v987 = vsel %vm985, %v976, 0
          %v990 = vsel %vm985, %v977, 0
          %992 = vmatprep.subr.bf16.mxu0 0
          %993 = vmatpush1.bf16.msra.mxu0 0
          %994 = vmatprep.subr.bf16.mxu0 0
          %995 = vmatpush1.bf16.msra.mxu0 0
          %996 = vmatprep.subr.bf16.mxu0 0
          %997 = vmatpush1.bf16.msra.mxu0 0
          %998 = vmatprep.subr.bf16.mxu0 0
          %999 = vmatpush1.bf16.msra.mxu0 0
          %1000 = vmatprep.subr.bf16.mxu0 0
          %1001 = vmatpush1.bf16.msra.mxu0 0
          %1002 = vmatprep.subr.bf16.mxu0 0
          %1003 = vmatpush1.bf16.msra.mxu0 0
          %1004 = vmatprep.subr.bf16.mxu0 0
          %1005 = vmatpush1.bf16.msra.mxu0 0
          %1006 = vmatprep.subr.bf16.mxu0 %v990
          %1007 = vmatpush1.bf16.msra.mxu0 %v987
          %1008 = vmatprep.subr.bf16.mxu0 0
          %1009 = vmatpush2.bf16.msra.mxu0 0
          %1010 = vmatprep.subr.bf16.mxu0 0
          %1011 = vmatpush2.bf16.msra.mxu0 0
          %1012 = vmatprep.subr.bf16.mxu0 0
          %1013 = vmatpush2.bf16.msra.mxu0 0
          %1014 = vmatprep.subr.bf16.mxu0 0
          %1015 = vmatpush2.bf16.msra.mxu0 0
          %1016 = vmatprep.subr.bf16.mxu0 0
          %1017 = vmatpush2.bf16.msra.mxu0 0
          %1018 = vmatprep.subr.bf16.mxu0 0
          %1019 = vmatpush2.bf16.msra.mxu0 0
          %1020 = vmatprep.subr.bf16.mxu0 0
          %1021 = vmatpush2.bf16.msra.mxu0 0
          %1022 = vmatprep.subr.bf16.mxu0 0
          %1023 = vmatpush2.bf16.msra.mxu0 0
          %1024 = vmatprep.mubr.bf16.mxu0 0
          %1025 = vmatmul.mubr.bf16.gmra.mxu0 %v980
          %v1026 = vpop.f32.mrf.mxu0
          %v1027 = vadd.f32 0.0, %v1026
          %v1028 = vpop.f32.mrf.mxu0
          %v1029 = vadd.f32 0.0, %v1028
          %v1030 = vpop.f32.mrf.mxu0
          %v1031 = vadd.f32 0.0, %v1030
          %v1032 = vpop.f32.mrf.mxu0
          %v1033 = vadd.f32 0.0, %v1032
          %1034 = vmatprep.mubr.bf16.mxu0 0
          %1035 = vmatmul.mubr.bf16.gmra.mxu0 %v983
          %v1036 = vpop.f32.mrf.mxu0
          %v1037 = vadd.f32 0.0, %v1036
          %v1038 = vpop.f32.mrf.mxu0
          %v1039 = vadd.f32 0.0, %v1038
          %v1040 = vpop.f32.mrf.mxu0
          %v1041 = vadd.f32 0.0, %v1040
          %v1042 = vpop.f32.mrf.mxu0
          %v1043 = vadd.f32 0.0, %v1042
          %1044 = vdwg.mxu0
          %v1049 = vunpack.c.l.b16 %v950
          %v1050 = vunpack.c.l.b16 %v951
          %v1051 = vunpack.c.l.b16 %v952
          %v1052 = vunpack.c.l.b16 %v953
          %v1053 = vpack.c.b16 %v1050, %v1049
          %v1054 = vpack.c.b16 %v1052, %v1051
          %v1056 = vsel %vm978, %v1053, 0
          %v1059 = vsel %vm978, %v1054, 0
          %v1062 = vsel %vm985, %v943, 0
          %v1065 = vsel %vm985, %v944, 0
          %1067 = vmatprep.subr.bf16.mxu0 0
          %1068 = vmatpush1.bf16.msra.mxu0 0
          %1069 = vmatprep.subr.bf16.mxu0 0
          %1070 = vmatpush1.bf16.msra.mxu0 0
          %1071 = vmatprep.subr.bf16.mxu0 0
          %1072 = vmatpush1.bf16.msra.mxu0 0
          %1073 = vmatprep.subr.bf16.mxu0 0
          %1074 = vmatpush1.bf16.msra.mxu0 0
          %1075 = vmatprep.subr.bf16.mxu0 0
          %1076 = vmatpush1.bf16.msra.mxu0 0
          %1077 = vmatprep.subr.bf16.mxu0 0
          %1078 = vmatpush1.bf16.msra.mxu0 0
          %1079 = vmatprep.subr.bf16.mxu0 0
          %1080 = vmatpush1.bf16.msra.mxu0 0
          %1081 = vmatprep.subr.bf16.mxu0 %v1065
          %1082 = vmatpush1.bf16.msra.mxu0 %v1062
          %1083 = vmatprep.subr.bf16.mxu0 0
          %1084 = vmatpush2.bf16.msra.mxu0 0
          %1085 = vmatprep.subr.bf16.mxu0 0
          %1086 = vmatpush2.bf16.msra.mxu0 0
          %1087 = vmatprep.subr.bf16.mxu0 0
          %1088 = vmatpush2.bf16.msra.mxu0 0
          %1089 = vmatprep.subr.bf16.mxu0 0
          %1090 = vmatpush2.bf16.msra.mxu0 0
          %1091 = vmatprep.subr.bf16.mxu0 0
          %1092 = vmatpush2.bf16.msra.mxu0 0
          %1093 = vmatprep.subr.bf16.mxu0 0
          %1094 = vmatpush2.bf16.msra.mxu0 0
          %1095 = vmatprep.subr.bf16.mxu0 0
          %1096 = vmatpush2.bf16.msra.mxu0 0
          %1097 = vmatprep.subr.bf16.mxu0 0
          %1098 = vmatpush2.bf16.msra.mxu0 0
          %1099 = vmatprep.mubr.bf16.mxu0 0
          %1100 = vmatmul.mubr.bf16.gmra.mxu0 %v1056
          %v1101 = vpop.f32.mrf.mxu0
          %v1102 = vadd.f32 %v1027, %v1101
          %v1103 = vpop.f32.mrf.mxu0
          %v1104 = vadd.f32 %v1029, %v1103
          %v1105 = vpop.f32.mrf.mxu0
          %v1106 = vadd.f32 %v1031, %v1105
          %v1107 = vpop.f32.mrf.mxu0
          %v1108 = vadd.f32 %v1033, %v1107
          %1109 = vmatprep.mubr.bf16.mxu0 0
          %1110 = vmatmul.mubr.bf16.gmra.mxu0 %v1059
          %v1111 = vpop.f32.mrf.mxu0
          %v1112 = vadd.f32 %v1037, %v1111
          %v1113 = vpop.f32.mrf.mxu0
          %v1114 = vadd.f32 %v1039, %v1113
          %v1115 = vpop.f32.mrf.mxu0
          %v1116 = vadd.f32 %v1041, %v1115
          %v1117 = vpop.f32.mrf.mxu0
          %v1118 = vadd.f32 %v1043, %v1117
          %1119 = vdwg.mxu0
          %s1120 = scalar_lea.vmem %s2, 32
          %v1121 = vld [vmem:[%s1120] sm:$0xf]
          %v1122 = vld [vmem:[%s1120 + $0x4] sm:$0xf]
          %v1123 = vld [vmem:[%s1120 + $0x8] sm:$0xf]
          %v1124 = vld [vmem:[%s1120 + $0xc] sm:$0xf]
          %v1129 = vunpack.c.l.b16 %v1121
          %v1130 = vunpack.c.l.b16 %v1122
          %v1131 = vunpack.c.l.b16 %v1123
          %v1132 = vunpack.c.l.b16 %v1124
          %v1133 = vpack.c.b16 %v1130, %v1129
          %v1134 = vpack.c.b16 %v1132, %v1131
          %1135 = vrot.lane.b32.xlu0 %v943, 96
          %v1136 = vpop.permute.xlu0 %1135
          %1137 = vrot.lane.b32.xlu0 %v944, 96
          %v1138 = vpop.permute.xlu0 %1137
          %1139 = vrot.lane.b32.xlu0 %v949, 96
          %v1140 = vpop.permute.xlu0 %1139
          %vm1141 = vcmask 785408
          %v1142 = vsel %vm1141, %v1136, %v1138
          %v1143 = vsel %vm1141, %v1138, %v1140
          %v1145 = vsel %vm978, %v1133, 0
          %v1148 = vsel %vm978, %v1134, 0
          %v1151 = vsel %vm985, %v1142, 0
          %v1154 = vsel %vm985, %v1143, 0
          %1156 = vmatprep.subr.bf16.mxu0 0
          %1157 = vmatpush1.bf16.msra.mxu0 0
          %1158 = vmatprep.subr.bf16.mxu0 0
          %1159 = vmatpush1.bf16.msra.mxu0 0
          %1160 = vmatprep.subr.bf16.mxu0 0
          %1161 = vmatpush1.bf16.msra.mxu0 0
          %1162 = vmatprep.subr.bf16.mxu0 0
          %1163 = vmatpush1.bf16.msra.mxu0 0
          %1164 = vmatprep.subr.bf16.mxu0 0
          %1165 = vmatpush1.bf16.msra.mxu0 0
          %1166 = vmatprep.subr.bf16.mxu0 0
          %1167 = vmatpush1.bf16.msra.mxu0 0
          %1168 = vmatprep.subr.bf16.mxu0 0
          %1169 = vmatpush1.bf16.msra.mxu0 0
          %1170 = vmatprep.subr.bf16.mxu0 %v1154
          %1171 = vmatpush1.bf16.msra.mxu0 %v1151
          %1172 = vmatprep.subr.bf16.mxu0 0
          %1173 = vmatpush2.bf16.msra.mxu0 0
          %1174 = vmatprep.subr.bf16.mxu0 0
          %1175 = vmatpush2.bf16.msra.mxu0 0
          %1176 = vmatprep.subr.bf16.mxu0 0
          %1177 = vmatpush2.bf16.msra.mxu0 0
          %1178 = vmatprep.subr.bf16.mxu0 0
          %1179 = vmatpush2.bf16.msra.mxu0 0
          %1180 = vmatprep.subr.bf16.mxu0 0
          %1181 = vmatpush2.bf16.msra.mxu0 0
          %1182 = vmatprep.subr.bf16.mxu0 0
          %1183 = vmatpush2.bf16.msra.mxu0 0
          %1184 = vmatprep.subr.bf16.mxu0 0
          %1185 = vmatpush2.bf16.msra.mxu0 0
          %1186 = vmatprep.subr.bf16.mxu0 0
          %1187 = vmatpush2.bf16.msra.mxu0 0
          %1188 = vmatprep.mubr.bf16.mxu0 0
          %1189 = vmatmul.mubr.bf16.gmra.mxu0 %v1145
          %v1190 = vpop.f32.mrf.mxu0
          %v1191 = vadd.f32 0.0, %v1190
          %v1192 = vpop.f32.mrf.mxu0
          %v1193 = vadd.f32 0.0, %v1192
          %v1194 = vpop.f32.mrf.mxu0
          %v1195 = vadd.f32 0.0, %v1194
          %v1196 = vpop.f32.mrf.mxu0
          %v1197 = vadd.f32 0.0, %v1196
          %1198 = vmatprep.mubr.bf16.mxu0 0
          %1199 = vmatmul.mubr.bf16.gmra.mxu0 %v1148
          %v1200 = vpop.f32.mrf.mxu0
          %v1201 = vadd.f32 0.0, %v1200
          %v1202 = vpop.f32.mrf.mxu0
          %v1203 = vadd.f32 0.0, %v1202
          %v1204 = vpop.f32.mrf.mxu0
          %v1205 = vadd.f32 0.0, %v1204
          %v1206 = vpop.f32.mrf.mxu0
          %v1207 = vadd.f32 0.0, %v1206
          %1208 = vdwg.mxu0
          %v1209 = vadd.f32 %v1102, %v1191
          %v1210 = vadd.f32 %v1104, %v1193
          %v1211 = vadd.f32 %v1106, %v1195
          %v1212 = vadd.f32 %v1108, %v1197
          %v1213 = vadd.f32 %v1112, %v1201
          %v1214 = vadd.f32 %v1114, %v1203
          %v1215 = vadd.f32 %v1116, %v1205
          %v1216 = vadd.f32 %v1118, %v1207
          %v1217 = vld [vmem:[%s3] sm:$0xff]
          %v1218 = vld [vmem:[%s3 + $0x8] sm:$0xff]
          %v1219 = vld [vmem:[%s3 + $0x10] sm:$0xff]
          %v1220 = vld [vmem:[%s3 + $0x18] sm:$0xff]
          %1222 = vset.pattern.permute.xlu0 0
          %1223 = vperm.xlu0 %1222, %v1217
          %v1224 = vpop.permute.xlu0 %1223
          %1227 = vset.pattern.permute.xlu0 0
          %1228 = vperm.xlu0 %1227, %v1218
          %v1229 = vpop.permute.xlu0 %1228
          %1232 = vset.pattern.permute.xlu0 0
          %1233 = vperm.xlu0 %1232, %v1219
          %v1234 = vpop.permute.xlu0 %1233
          %1237 = vset.pattern.permute.xlu0 0
          %1238 = vperm.xlu0 %1237, %v1220
          %v1239 = vpop.permute.xlu0 %1238
          %v1241 = vadd.f32 %v1209, %v1224
          %v1242 = vadd.f32 %v1210, %v1224
          %v1243 = vadd.f32 %v1211, %v1229
          %v1244 = vadd.f32 %v1212, %v1229
          %v1245 = vadd.f32 %v1213, %v1234
          %v1246 = vadd.f32 %v1214, %v1234
          %v1247 = vadd.f32 %v1215, %v1239
          %v1248 = vadd.f32 %v1216, %v1239
          %v1249 = vmax.f32 %v1241, 0.0
          %v1250 = vmax.f32 %v1242, 0.0
          %v1251 = vmax.f32 %v1243, 0.0
          %v1252 = vmax.f32 %v1244, 0.0
          %v1253 = vmax.f32 %v1245, 0.0
          %v1254 = vmax.f32 %v1246, 0.0
          %v1255 = vmax.f32 %v1247, 0.0
          %v1256 = vmax.f32 %v1248, 0.0
          %v1257 = vld [vmem:[#allocation2] sm:$0xff]
          %v1258 = vld [vmem:[#allocation2 + $0x8] sm:$0xff]
          %v1259 = vld [vmem:[#allocation2 + $0x10] sm:$0xff]
          %v1260 = vld [vmem:[#allocation2 + $0x18] sm:$0xff]
          %v1261 = vadd.f32 %v1249, %v1250
          %1262 = vadd.xlane.f32.xlu0 %v1261
          %v1263 = vpop.xlane.xlu0 %1262
          %v1264 = vadd.f32 %v1251, %v1252
          %1265 = vadd.xlane.f32.xlu0 %v1264
          %v1266 = vpop.xlane.xlu0 %1265
          %v1267 = vadd.f32 %v1253, %v1254
          %1268 = vadd.xlane.f32.xlu0 %v1267
          %v1269 = vpop.xlane.xlu0 %1268
          %v1270 = vadd.f32 %v1255, %v1256
          %1271 = vadd.xlane.f32.xlu0 %v1270
          %v1272 = vpop.xlane.xlu0 %1271
          %v1273 = vadd.f32 %v1257, %v1263
          %v1274 = vadd.f32 %v1258, %v1266
          %v1275 = vadd.f32 %v1259, %v1269
          %v1276 = vadd.f32 %v1260, %v1272
          %vm1277 = vcmask 7168
          %1278 = vst.msk [vmem:[#allocation2] sm:$0xff] %vm1277, %v1273
          %1279 = vst.msk [vmem:[#allocation2 + $0x8] sm:$0xff] %vm1277, %v1274
          %1280 = vst.msk [vmem:[#allocation2 + $0x10] sm:$0xff] %vm1277, %v1275
          %1281 = vst.msk [vmem:[#allocation2 + $0x18] sm:$0xff] %vm1277, %v1276
          %s1282 = smul.u32 %s28, 256
          %v1283 = vpack.c.bf16 %v1251, %v1249
          %v1284 = vpack.c.bf16 %v1252, %v1250
          %v1285 = vpack.c.bf16 %v1255, %v1253
          %v1286 = vpack.c.bf16 %v1256, %v1254
          %v1291 = vunpack.c.l.b16 %v1283
          %v1292 = vunpack.c.l.b16 %v1284
          %v1293 = vunpack.c.h.b16 %v1283
          %v1294 = vunpack.c.h.b16 %v1284
          %v1295 = vunpack.c.l.b16 %v1285
          %v1296 = vunpack.c.l.b16 %v1286
          %v1297 = vunpack.c.h.b16 %v1285
          %v1298 = vunpack.c.h.b16 %v1286
          %v1299 = vpack.c.b16 %v1292, %v1291
          %v1300 = vpack.c.b16 %v1294, %v1293
          %v1301 = vpack.c.b16 %v1296, %v1295
          %v1302 = vpack.c.b16 %v1298, %v1297
          %s1307 = sshra.s32 %s1282, 7
          %s1308 = sand.u32 %s1282, 127
          %s1309 = smul.addr %s1307, 4
          %s1310 = scalar_lea.vmem [#allocation4], %s1309
          %1311 = vst [vmem:[%s1310] sm:$0xff] %v1299
          %1312 = vst [vmem:[%s1310 + $0x8] sm:$0xff] %v1300
          %1313 = vst [vmem:[%s1310 + $0x10] sm:$0xff] %v1301
          %1314 = vst [vmem:[%s1310 + $0x18] sm:$0xff] %v1302
        $region175: #{esanet_forward.1} parent=158 // pred_fallthru
          _
        %p1315 = scmp.eq.s32.totalorder %s27, 1
        %p1316 = pnand %p1315, %p920
        %p1317 = pneg %p1316
        // Predicated region
        $region176: #{esanet_forward.1} parent=158 // pred_check
          _
        $region177: #{esanet_forward.1} parent=158 // pred_check_branch
          %1319 = sbr.rel (%p1316) target = $region179
        $region178: #{esanet_forward.1} parent=158 // pred_region
          %v1320 = vld [vmem:[#allocation2] sm:$0xff]
          %v1321 = vld [vmem:[#allocation2 + $0x8] sm:$0xff]
          %v1322 = vld [vmem:[#allocation2 + $0x10] sm:$0xff]
          %v1323 = vld [vmem:[#allocation2 + $0x18] sm:$0xff]
          %v1324 = vmul.f32 %v1320, 0.00390625
          %v1325 = vmul.f32 %v1321, 0.00390625
          %v1326 = vmul.f32 %v1322, 0.00390625
          %v1327 = vmul.f32 %v1323, 0.00390625
          %v1328 = vld [vmem:[%s4] sm:$0xff]
          %v1329 = vld [vmem:[%s4 + $0x8] sm:$0xff]
          %1331 = vset.pattern.permute.xlu0 0
          %1332 = vperm.xlu0 %1331, %v1324
          %v1333 = vpop.permute.xlu0 %1332
          %1336 = vset.pattern.permute.xlu0 0
          %1337 = vperm.xlu0 %1336, %v1325
          %v1338 = vpop.permute.xlu0 %1337
          %v1340 = vmul.f32 %v1328, %v1333
          %v1341 = vmul.f32 %v1329, %v1338
          %vm1342 = vcmask 31744
          %v1343 = vsel %vm1342, %v1340, 0.0
          %v1344 = vsel %vm1342, %v1341, 0.0
          %v1345 = vadd.f32 %v1343, %v1344
          %v1346 = vrot.slane %v1345, 4
          %v1347 = vadd.f32 %v1345, %v1346
          %v1348 = vrot.slane %v1347, 2
          %v1349 = vadd.f32 %v1347, %v1348
          %v1350 = vrot.slane %v1349, 1
          %v1351 = vadd.f32 %v1349, %v1350
          %v1352 = vld [vmem:[%s5] sm:$0x1]
          %v1353 = vadd.f32 %v1351, %v1352
          %v1354 = vmax.f32 %v1353, 0.0
          %v1355 = vld [vmem:[%s6] sm:$0xff]
          %v1356 = vld [vmem:[%s6 + $0x8] sm:$0xff]
          %v1357 = vlaneseq
          %v1358 = vshrl.u32 %v1357, 7
          %v1359 = vsub.s32 0, %v1358
          %v1360 = vrot.slane %v1354, %v1359
          %v1361 = vmul.f32 %v1355, %v1360
          %v1362 = vmul.f32 %v1356, %v1360
          %v1363 = vsel %vm1342, %v1361, 0.0
          %1364 = vadd.xlane.f32.xlu0 %v1363
          %v1365 = vpop.xlane.xlu0 %1364
          %v1366 = vsel %vm1342, %v1362, 0.0
          %1367 = vadd.xlane.f32.xlu0 %v1366
          %v1368 = vpop.xlane.xlu0 %1367
          %v1369 = vld [vmem:[%s7] sm:$0xff]
          %v1370 = vld [vmem:[%s7 + $0x8] sm:$0xff]
          %v1371 = vadd.f32 %v1365, %v1369
          %v1372 = vadd.f32 %v1368, %v1370
          %v1373 = vsub.f32 0.0, %v1371
          %v1374 = vsub.f32 0.0, %v1372
          %v1375 = vmul.f32 %v1373, 1.442695
          %v1376 = vpow.pop %v1375
          %v1377 = vmul.f32 %v1374, 1.442695
          %v1378 = vpow.pop %v1377
          %v1379 = vadd.f32 %v1376, 1.0
          %v1380 = vadd.f32 %v1378, 1.0
          %v1381 = vrcp.pop %v1379
          %v1382 = vmul.f32 1.0, %v1381
          %v1383 = vrcp.pop %v1380
          %v1384 = vmul.f32 1.0, %v1383
          %vm1385 = vcmask 7168
          %1386 = vst.msk [vmem:[#allocation3] sm:$0xff] %vm1385, %v1382
          %1387 = vst.msk [vmem:[#allocation3 + $0x8] sm:$0xff] %vm1385, %v1384
          %s1388 = scalar_lea.vmem %s4, 16
          %v1389 = vld [vmem:[%s1388] sm:$0xff]
          %v1390 = vld [vmem:[%s1388 + $0x8] sm:$0xff]
          %1392 = vset.pattern.permute.xlu0 0
          %1393 = vperm.xlu0 %1392, %v1326
          %v1394 = vpop.permute.xlu0 %1393
          %1397 = vset.pattern.permute.xlu0 0
          %1398 = vperm.xlu0 %1397, %v1327
          %v1399 = vpop.permute.xlu0 %1398
          %v1401 = vmul.f32 %v1389, %v1394
          %v1402 = vmul.f32 %v1390, %v1399
          %v1403 = vsel %vm1342, %v1401, 0.0
          %v1404 = vsel %vm1342, %v1402, 0.0
          %v1405 = vadd.f32 %v1403, %v1404
          %v1406 = vrot.slane %v1405, 4
          %v1407 = vadd.f32 %v1405, %v1406
          %v1408 = vrot.slane %v1407, 2
          %v1409 = vadd.f32 %v1407, %v1408
          %v1410 = vrot.slane %v1409, 1
          %v1411 = vadd.f32 %v1409, %v1410
          %s1412 = scalar_lea.vmem %s5, 1
          %v1413 = vld [vmem:[%s1412] sm:$0x1]
          %v1414 = vadd.f32 %v1411, %v1413
          %v1415 = vmax.f32 %v1414, 0.0
          %s1416 = scalar_lea.vmem %s6, 16
          %v1417 = vld [vmem:[%s1416] sm:$0xff]
          %v1418 = vld [vmem:[%s1416 + $0x8] sm:$0xff]
          %v1419 = vlaneseq
          %v1420 = vshrl.u32 %v1419, 7
          %v1421 = vsub.s32 0, %v1420
          %v1422 = vrot.slane %v1415, %v1421
          %v1423 = vmul.f32 %v1417, %v1422
          %v1424 = vmul.f32 %v1418, %v1422
          %v1425 = vsel %vm1342, %v1423, 0.0
          %1426 = vadd.xlane.f32.xlu0 %v1425
          %v1427 = vpop.xlane.xlu0 %1426
          %v1428 = vsel %vm1342, %v1424, 0.0
          %1429 = vadd.xlane.f32.xlu0 %v1428
          %v1430 = vpop.xlane.xlu0 %1429
          %s1431 = scalar_lea.vmem %s7, 16
          %v1432 = vld [vmem:[%s1431] sm:$0xff]
          %v1433 = vld [vmem:[%s1431 + $0x8] sm:$0xff]
          %v1434 = vadd.f32 %v1427, %v1432
          %v1435 = vadd.f32 %v1430, %v1433
          %v1436 = vsub.f32 0.0, %v1434
          %v1437 = vsub.f32 0.0, %v1435
          %v1438 = vmul.f32 %v1436, 1.442695
          %v1439 = vpow.pop %v1438
          %v1440 = vmul.f32 %v1437, 1.442695
          %v1441 = vpow.pop %v1440
          %v1442 = vadd.f32 %v1439, 1.0
          %v1443 = vadd.f32 %v1441, 1.0
          %v1444 = vrcp.pop %v1442
          %v1445 = vmul.f32 1.0, %v1444
          %v1446 = vrcp.pop %v1443
          %v1447 = vmul.f32 1.0, %v1446
          %1448 = vst.msk [vmem:[#allocation3 + $0x10] sm:$0xff] %vm1385, %v1445
          %1449 = vst.msk [vmem:[#allocation3 + $0x18] sm:$0xff] %vm1385, %v1447
        $region179: #{esanet_forward.1} parent=158 // pred_fallthru
          _
        // Predicated region
        $region180: #{esanet_forward.1} parent=158 // pred_check
          %p1450 = pneg %p1315
        $region181: #{esanet_forward.1} parent=158 // pred_check_branch
          %1452 = sbr.rel (%p1450) target = $region183
        $region182: #{esanet_forward.1} parent=158 // pred_region
          %s1453 = smul.u32 %s28, 256
          %s1454 = sshra.s32 %s1453, 7
          %s1455 = sand.u32 %s1453, 127
          %s1456 = smul.addr %s1454, 4
          %s1457 = scalar_lea.vmem [#allocation4], %s1456
          %v1458 = vld [vmem:[%s1457] sm:$0xff]
          %v1459 = vld [vmem:[%s1457 + $0x8] sm:$0xff]
          %v1460 = vld [vmem:[%s1457 + $0x10] sm:$0xff]
          %v1461 = vld [vmem:[%s1457 + $0x18] sm:$0xff]
          %v1462 = vunpack.c.l.bf16 %v1458
          %v1463 = vunpack.c.h.bf16 %v1458
          %v1464 = vunpack.c.l.bf16 %v1459
          %v1465 = vunpack.c.h.bf16 %v1459
          %v1466 = vunpack.c.l.bf16 %v1460
          %v1467 = vunpack.c.h.bf16 %v1460
          %v1468 = vunpack.c.l.bf16 %v1461
          %v1469 = vunpack.c.h.bf16 %v1461
          %v1470 = vld [vmem:[#allocation3] sm:$0xff]
          %v1471 = vld [vmem:[#allocation3 + $0x8] sm:$0xff]
          %v1472 = vld [vmem:[#allocation3 + $0x10] sm:$0xff]
          %v1473 = vld [vmem:[#allocation3 + $0x18] sm:$0xff]
          %1475 = vset.pattern.permute.xlu0 0
          %1476 = vperm.xlu0 %1475, %v1470
          %v1477 = vpop.permute.xlu0 %1476
          %1480 = vset.pattern.permute.xlu0 0
          %1481 = vperm.xlu0 %1480, %v1471
          %v1482 = vpop.permute.xlu0 %1481
          %v1484 = vmul.f32 %v1462, %v1477
          %v1485 = vmul.f32 %v1463, %v1477
          %v1486 = vmul.f32 %v1464, %v1482
          %v1487 = vmul.f32 %v1465, %v1482
          %1489 = vset.pattern.permute.xlu0 0
          %1490 = vperm.xlu0 %1489, %v1472
          %v1491 = vpop.permute.xlu0 %1490
          %1494 = vset.pattern.permute.xlu0 0
          %1495 = vperm.xlu0 %1494, %v1473
          %v1496 = vpop.permute.xlu0 %1495
          %v1498 = vmul.f32 %v1466, %v1491
          %v1499 = vmul.f32 %v1467, %v1491
          %v1500 = vmul.f32 %v1468, %v1496
          %v1501 = vmul.f32 %v1469, %v1496
          %v1502 = vadd.f32 %v1484, %v1498
          %v1503 = vadd.f32 %v1485, %v1499
          %v1504 = vadd.f32 %v1486, %v1500
          %v1505 = vadd.f32 %v1487, %v1501
          %v1506 = vld [vmem:[%s8] sm:$0xf]
          %v1507 = vpack.c.bf16 %v1504, %v1502
          %v1508 = vpack.c.bf16 %v1505, %v1503
          %v1509 = vld [vmem:[%s9] sm:$0xff]
          %1511 = vset.pattern.permute.xlu0 0
          %1512 = vperm.xlu0 %1511, %v1509
          %v1513 = vpop.permute.xlu0 %1512
          %vm1515 = vcmask 130048
          %v1517 = vsel %vm1515, %v1506, 0
          %1519 = vmatprep.subr.bf16.mxu0 0
          %1520 = vmatpush1.bf16.msra.mxu0 0
          %1521 = vmatprep.subr.bf16.mxu0 0
          %1522 = vmatpush1.bf16.msra.mxu0 0
          %1523 = vmatprep.subr.bf16.mxu0 0
          %1524 = vmatpush1.bf16.msra.mxu0 0
          %1525 = vmatprep.subr.bf16.mxu0 0
          %1526 = vmatpush1.bf16.msra.mxu0 0
          %1527 = vmatprep.subr.bf16.mxu0 0
          %1528 = vmatpush1.bf16.msra.mxu0 0
          %1529 = vmatprep.subr.bf16.mxu0 0
          %1530 = vmatpush1.bf16.msra.mxu0 0
          %1531 = vmatprep.subr.bf16.mxu0 0
          %1532 = vmatpush1.bf16.msra.mxu0 0
          %1533 = vmatprep.subr.bf16.mxu0 %v1508
          %1534 = vmatpush1.bf16.msra.mxu0 %v1507
          %1535 = vmatprep.subr.bf16.mxu0 0
          %1536 = vmatpush2.bf16.msra.mxu0 0
          %1537 = vmatprep.subr.bf16.mxu0 0
          %1538 = vmatpush2.bf16.msra.mxu0 0
          %1539 = vmatprep.subr.bf16.mxu0 0
          %1540 = vmatpush2.bf16.msra.mxu0 0
          %1541 = vmatprep.subr.bf16.mxu0 0
          %1542 = vmatpush2.bf16.msra.mxu0 0
          %1543 = vmatprep.subr.bf16.mxu0 0
          %1544 = vmatpush2.bf16.msra.mxu0 0
          %1545 = vmatprep.subr.bf16.mxu0 0
          %1546 = vmatpush2.bf16.msra.mxu0 0
          %1547 = vmatprep.subr.bf16.mxu0 0
          %1548 = vmatpush2.bf16.msra.mxu0 0
          %1549 = vmatprep.subr.bf16.mxu0 0
          %1550 = vmatpush2.bf16.msra.mxu0 0
          %1551 = vmatprep.mubr.bf16.mxu0 0
          %1552 = vmatmul.mubr.bf16.gmra.mxu0 %v1517
          %v1553 = vpop.f32.mrf.mxu0
          %v1554 = vadd.f32 %v1513, %v1553
          %v1555 = vpop.f32.mrf.mxu0
          %v1556 = vadd.f32 %v1513, %v1555
          %v1557 = vpop.f32.mrf.mxu0
          %v1558 = vpop.f32.mrf.mxu0
          %1559 = vdwg.mxu0
          %1560 = vst [vmem:[%s915] sm:$0xff] %v1554
          %1561 = vst [vmem:[%s915 + $0x8] sm:$0xff] %v1556
        $region183: #{esanet_forward.1} parent=158 // pred_fallthru
          _
        %s1562 = smul.u32 %s28, %s27
        %s1563 = smul.u32 2, %s1562
        %p1564 = scmp.lt.s32.totalorder %s26, 1
        %s1565 = scalar_select %p1564, %s26, 1
        %p1566 = scmp.lt.s32.totalorder %s1563, 1
        %s1567 = scalar_select %p1566, %s1563, 1
        %s1568 = smul.addr %s1565, 2
        %s1569 = sadd.s32 %s1567, %s1568
        %s1570 = smul.addr %s1569, 8
        %s1571 = scalar_lea.vmem %s10, %s1570
        // Predicated region
        $region184: #{esanet_forward.1} parent=158 // pred_check
          %p1572 = pneg %p298
        $region185: #{esanet_forward.1} parent=158 // pred_check_branch
          %1574 = sbr.rel (%p1572) target = $region187
        $region186: #{esanet_forward.1} parent=158 // pred_region
          %s1575 = smul.u32 %s28, %s27
          %s1576 = smul.u32 2, %s1575
        $region187: #{esanet_forward.1} parent=158 // pred_fallthru
          _
      $region159: #{esanet_forward.1} parent=5 // pred_fallthru
        _
      %p1577 = scmp.le.s32.totalorder 2, %s16
      // Predicated region
      $region188: #{esanet_forward.1} parent=5 // pred_check
        %p1578 = pneg %p1577
      $region189: #{esanet_forward.1} parent=5 // pred_check_branch
        %1580 = sbr.rel (%p1578) target = $region191
      $region190: #{esanet_forward.1} parent=5 // pred_region
        %s1581 = ssub.s32 %s16, 2
        // Predicated region
        $region192: #{esanet_forward.1} parent=190 // pred_check
          %p1582 = pneg %p304
        $region193: #{esanet_forward.1} parent=190 // pred_check_branch
          %1584 = sbr.rel (%p1582) target = $region195
        $region194: #{esanet_forward.1} parent=190 // pred_region
          %s1585 = smul.u32 %s31, %s30
          %s1586 = smul.u32 2, %s1585
          %p1587 = scmp.lt.s32.totalorder %s29, 1
          %s1588 = scalar_select %p1587, %s29, 1
          %p1589 = scmp.lt.s32.totalorder %s1586, 1
          %s1590 = scalar_select %p1589, %s1586, 1
          %s1591 = smul.addr %s1588, 2
          %s1592 = sadd.s32 %s1590, %s1591
          %s1593 = smul.addr %s1592, 8
          %s1594 = scalar_lea.vmem %s10, %s1593
        $region195: #{esanet_forward.1} parent=190 // pred_fallthru
          _
      $region191: #{esanet_forward.1} parent=5 // pred_fallthru
        _
    $region6: #{esanet_forward.1} parent=1 // loop_footer
      %s20 = sadd.s32 1, %s16
    $region7: #{esanet_forward.1} parent=1 // loop_footer_branch
      %15 = sbr.rel target = $region3
    $region8: #{esanet_forward.1} parent=1 // loop_exit
      _

</llo_original>
